<compile_context>
chip_gen: v5e
topology: v5e:2x2
jax: 0.10.0
libtpu: 0.0.40
codegen_flags: <defaults>
</compile_context>

<pallas_src>
import math

import jax
import jax.numpy as jnp
from jax.experimental import pallas as pl
from jax.experimental.pallas import tpu as pltpu


# ---------------------------------------------------------------------------
# Parameter preparation (plain XLA ops, run once per weight update).
# ---------------------------------------------------------------------------
def _conv2d_toeplitz_half(w2d, H, W):
    """T (H*W, H*W) s.t. out_flat = in_flat @ T realizes the SAME-padded k x k
    single-channel conv with weights w2d (k, k), PyTorch cross-correlation,
    zero padding k//2."""
    w2d = jnp.asarray(w2d, jnp.float32)
    k = int(w2d.shape[-1])
    pad = k // 2
    tc = jnp.zeros((H * W, H * W), jnp.float32)
    for dy in range(k):
        ey = jnp.eye(H, k=pad - dy, dtype=jnp.float32)
        for dx in range(k):
            ex = jnp.eye(W, k=pad - dx, dtype=jnp.float32)
            tc = tc + w2d[dy, dx] * jnp.kron(ey, ex)
    return tc


def prepare_params(p, H, W):
    """Pack raw module parameters into the operands the fused kernel consumes."""
    C = p["fuse_w"].shape[0]
    Cr = p["ca_r_w1"].shape[0]
    # Fold inference-mode BatchNorm into the 1x1 fusion conv.
    a = p["bn_gamma"] / jnp.sqrt(p["bn_var"] + p["bn_eps"])
    wfuse = a[:, None] * p["fuse_w"]                                    # (C, 2C)
    bfuse = a * (p["fuse_b"] - p["bn_mean"]) + p["bn_beta"]             # (C,)
    # Batch the two SE MLPs: stacked W1, block-diagonal W2.
    w1cat = jnp.concatenate([p["ca_r_w1"], p["ca_t_w1"]], axis=0)       # (2Cr, C)
    z = jnp.zeros((C, Cr), jnp.float32)
    w2blk = jnp.concatenate(
        [jnp.concatenate([p["ca_r_w2"], z], axis=1),
         jnp.concatenate([z, p["ca_t_w2"]], axis=1)], axis=0)           # (2C, 2Cr)
    return dict(
        wf_r=wfuse[:, :C].astype(jnp.float32),                          # (C, C)
        wf_t=wfuse[:, C:].astype(jnp.float32),                          # (C, C)
        bfuse=bfuse.astype(jnp.float32)[:, None],                       # (C, 1)
        w1cat=w1cat.astype(jnp.float32),
        w2blk=w2blk.astype(jnp.float32),
        # bf16 storage halves HBM traffic of the dominant operands;
        # f32 accumulation in-kernel keeps accuracy.
        tzr_max=_conv2d_toeplitz_half(p["sa_r_w"][0], H, W).astype(jnp.bfloat16),
        tzr_mean=_conv2d_toeplitz_half(p["sa_r_w"][1], H, W).astype(jnp.bfloat16),
        tzt_max=_conv2d_toeplitz_half(p["sa_t_w"][0], H, W).astype(jnp.bfloat16),
        tzt_mean=_conv2d_toeplitz_half(p["sa_t_w"][1], H, W).astype(jnp.bfloat16),
        sa_bias=jnp.array([p["sa_r_b"], p["sa_t_b"]], jnp.float32),     # (2,) SMEM
    )


# ---------------------------------------------------------------------------
# Fused kernel: one grid step = one block of batch elements, (C, H*W) tiles.
# ---------------------------------------------------------------------------
def _make_cocbam_kernel(C, HW, BB):
    inv_hw = 1.0 / float(HW)
    inv_c = 1.0 / float(C)

    def kernel(r_ref, t_ref, wfr_ref, wft_ref, bf_ref, w1_ref, w2_ref,
               tzr_max_ref, tzr_mean_ref, tzt_max_ref, tzt_mean_ref, sab_ref,
               out_r_ref, out_t_ref):
        # Grid-invariant operands: load (and upcast bf16 -> f32) once per step,
        # hoisted out of the batch loop.
        wfr = wfr_ref[...]                                         # (C, C)
        wft = wft_ref[...]                                         # (C, C)
        bf = bf_ref[...]                                           # (C, 1)
        w1 = w1_ref[...]                                           # (2Cr, C)
        w2 = w2_ref[...]                                           # (2C, 2Cr)
        tzr_max = tzr_max_ref[...].astype(jnp.float32)             # (HW, HW)
        tzr_mean = tzr_mean_ref[...].astype(jnp.float32)
        tzt_max = tzt_max_ref[...].astype(jnp.float32)
        tzt_mean = tzt_mean_ref[...].astype(jnp.float32)
        bias_r = sab_ref[0]                                        # SMEM scalar
        bias_t = sab_ref[1]                                        # SMEM scalar

        def branch(inp, ws_c, tz_max, tz_mean, bias):
            xc = ws_c * inp                                        # (C, HW)
            cm = jnp.max(xc, axis=0, keepdims=True)                # (1, HW)
            cv = jnp.sum(xc, axis=0, keepdims=True) * inv_c        # (1, HW)
            logit = (jnp.dot(cm, tz_max, preferred_element_type=jnp.float32)
                     + jnp.dot(cv, tz_mean, preferred_element_type=jnp.float32)
                     + bias)                                       # (1, HW)
            att = jax.nn.sigmoid(logit)
            return xc * att + inp

        for b in range(BB):          # static unrolled loop over the batch block
            R = r_ref[b]                                           # (C, HW)
            T = t_ref[b]                                           # (C, HW)

            # 1) stream fusion: 1x1 conv (+ folded BN) + ReLU, no concat
            x = (jnp.dot(wfr, R, preferred_element_type=jnp.float32)
                 + jnp.dot(wft, T, preferred_element_type=jnp.float32))
            x = jnp.maximum(x + bf, 0.0)                           # (C, HW)

            # 2) channel attention for both branches (batched SE MLP)
            vmax = jnp.max(x, axis=1, keepdims=True)               # (C, 1)
            vavg = jnp.sum(x, axis=1, keepdims=True) * inv_hw      # (C, 1)
            pooled = jnp.concatenate([vmax, vavg], axis=1)         # (C, 2)
            h = jnp.maximum(
                jnp.dot(w1, pooled, preferred_element_type=jnp.float32),
                0.0)                                               # (2Cr, 2)
            se = jnp.dot(w2, h, preferred_element_type=jnp.float32)  # (2C, 2)
            ws = jax.nn.sigmoid(jnp.sum(se, axis=1, keepdims=True))  # (2C, 1)

            # 3) spatial attention + gating + residual, per branch
            out_r_ref[b] = branch(R, ws[0:C], tzr_max, tzr_mean, bias_r)
            out_t_ref[b] = branch(T, ws[C:2 * C], tzt_max, tzt_mean, bias_t)

    return kernel


def cocbam_forward_pallas(R, T, prep, *, block_batch=None):
    """R, T: (B, C, H, W) float32.  prep: output of prepare_params.

    block_batch: batch elements processed per grid step.  Default ceil(B/2)
    (<=2 grid steps: megacore-friendly on v7x, amortizes per-step overhead on
    single-TC v5e/v6e).  Set block_batch=B on v5e/v6e to collapse to one step.
    """
    B, C, H, W = R.shape
    HW = H * W
    C2 = 2 * C
    Cr2 = prep["w1cat"].shape[0]

    if block_batch is None:
        block_batch = pl.cdiv(B, 2)
    grid_b = pl.cdiv(B, block_batch)

    R2 = R.reshape(B, C, HW)          # free layout plumbing -> lane-dense (HW on lanes)
    T2 = T.reshape(B, C, HW)

    def img_spec():
        return pl.BlockSpec((block_batch, C, HW), lambda g: (g, 0, 0))

    def const_spec(shape):
        nd = len(shape)
        # Grid-invariant operand: single buffer (never re-DMA'd), saves VMEM.
        return pl.BlockSpec(shape, lambda g: (0,) * nd,
                            pipeline_mode=pl.Buffered(1))

    out_r, out_t = pl.pallas_call(
        _make_cocbam_kernel(C, HW, block_batch),
        out_shape=(jax.ShapeDtypeStruct((B, C, HW), jnp.float32),
                   jax.ShapeDtypeStruct((B, C, HW), jnp.float32)),
        grid_spec=pltpu.PrefetchScalarGridSpec(
            num_scalar_prefetch=0,
            grid=(grid_b,),
            in_specs=[
                img_spec(),                                   # R
                img_spec(),                                   # T
                const_spec((C, C)),                           # fused conv+BN W (R half)
                const_spec((C, C)),                           # fused conv+BN W (T half)
                const_spec((C, 1)),                           # fused conv+BN bias
                const_spec((Cr2, C)),                         # stacked SE W1
                const_spec((C2, Cr2)),                        # block-diag SE W2
                const_spec((HW, HW)),                         # Toeplitz R, max half
                const_spec((HW, HW)),                         # Toeplitz R, mean half
                const_spec((HW, HW)),                         # Toeplitz T, max half
                const_spec((HW, HW)),                         # Toeplitz T, mean half
                pl.BlockSpec(memory_space=pltpu.MemorySpace.SMEM),  # SA conv biases
            ],
            out_specs=[img_spec(), img_spec()],
        ),
        compiler_params=pltpu.CompilerParams(dimension_semantics=("parallel",)),
    )(R2, T2, prep["wf_r"], prep["wf_t"], prep["bfuse"], prep["w1cat"],
      prep["w2blk"], prep["tzr_max"], prep["tzr_mean"], prep["tzt_max"],
      prep["tzt_mean"], prep["sa_bias"])

    return out_r.reshape(B, C, H, W), out_t.reshape(B, C, H, W)


# ---------------------------------------------------------------------------
# Pure-JAX reference (high precision) for verification.
# ---------------------------------------------------------------------------
def cocbam_ref(R, T, p):
    hp = jax.lax.Precision.HIGHEST
    cat = jnp.concatenate([R, T], axis=1)
    x = jax.lax.conv_general_dilated(
        cat, p["fuse_w"][:, :, None, None], (1, 1), "VALID",
        dimension_numbers=("NCHW", "OIHW", "NCHW"), precision=hp)
    x = x + p["fuse_b"][None, :, None, None]
    a = p["bn_gamma"] / jnp.sqrt(p["bn_var"] + p["bn_eps"])
    x = (a[None, :, None, None] * (x - p["bn_mean"][None, :, None, None])
         + p["bn_beta"][None, :, None, None])
    x = jnp.maximum(x, 0.0)

    def ca(w1, w2):
        vmax = jnp.max(x, axis=(2, 3))
        vavg = jnp.mean(x, axis=(2, 3))

        def se(v):
            hdn = jnp.maximum(jnp.dot(v, w1.T, precision=hp), 0.0)
            return jnp.dot(hdn, w2.T, precision=hp)

        return jax.nn.sigmoid(se(vmax) + se(vavg))[:, :, None, None]

    Rc = ca(p["ca_r_w1"], p["ca_r_w2"]) * R
    Tc = ca(p["ca_t_w1"], p["ca_t_w2"]) * T

    def sa(xc, w, b):
        k = w.shape[-1]
        pad = k // 2
        cm = jnp.max(xc, axis=1, keepdims=True)
        cv = jnp.mean(xc, axis=1, keepdims=True)
        s = jnp.concatenate([cm, cv], axis=1)
        o = jax.lax.conv_general_dilated(
            s, w[None], (1, 1), [(pad, pad), (pad, pad)],
            dimension_numbers=("NCHW", "OIHW", "NCHW"), precision=hp) + b
        return jax.nn.sigmoid(o)

    R_cs = sa(Rc, p["sa_r_w"], p["sa_r_b"]) * Rc
    T_cs = sa(Tc, p["sa_t_w"], p["sa_t_b"]) * Tc
    return R_cs + R, T_cs + T


if __name__ == "__main__":
    key = jax.random.PRNGKey(0)
    B, C, H, W = 2, 32, 16, 16
    reduction = 8
    ksize = 7                      # SpatialAttention kernel_size (module-configurable)
    Cr = C // reduction
    ks = jax.random.split(key, 16)

    R = jax.random.normal(ks[0], (B, C, H, W), jnp.float32)
    T = jax.random.normal(ks[1], (B, C, H, W), jnp.float32)

    raw = dict(
        # Conv2d(2C, C, 1) with bias + BatchNorm2d(C) (inference stats)
        fuse_w=jax.random.normal(ks[2], (C, 2 * C), jnp.float32) * math.sqrt(2.0 / (2 * C)),
        fuse_b=0.1 * jax.random.normal(ks[3], (C,), jnp.float32),
        bn_gamma=1.0 + 0.1 * jax.random.normal(ks[4], (C,), jnp.float32),
        bn_beta=0.1 * jax.random.normal(ks[5], (C,), jnp.float32),
        bn_mean=0.1 * jax.random.normal(ks[6], (C,), jnp.float32),
        bn_var=jax.random.uniform(ks[7], (C,), jnp.float32, 0.5, 1.5),
        bn_eps=1e-5,
        # ChannelAttention_r / _t: Conv2d(C, C//r, 1) & Conv2d(C//r, C, 1), no bias
        ca_r_w1=jax.random.normal(ks[8], (Cr, C), jnp.float32) * math.sqrt(2.0 / C),
        ca_r_w2=jax.random.normal(ks[9], (C, Cr), jnp.float32) * math.sqrt(2.0 / Cr),
        ca_t_w1=jax.random.normal(ks[10], (Cr, C), jnp.float32) * math.sqrt(2.0 / C),
        ca_t_w2=jax.random.normal(ks[11], (C, Cr), jnp.float32) * math.sqrt(2.0 / Cr),
        # SpatialAttention_r / _t: Conv2d(2, 1, k, padding=k//2) with bias
        sa_r_w=0.1 * jax.random.normal(ks[12], (2, ksize, ksize), jnp.float32),
        sa_r_b=0.05,
        sa_t_w=0.1 * jax.random.normal(ks[13], (2, ksize, ksize), jnp.float32),
        sa_t_b=-0.03,
    )

    prepared = prepare_params(raw, H, W)       # once per weight update

    out_r, out_t = cocbam_forward_pallas(R, T, prepared)
    out_r = jax.block_until_ready(out_r)
    out_t = jax.block_until_ready(out_t)

    ref_r, ref_t = cocbam_ref(R, T, raw)
    assert jnp.allclose(out_r, ref_r, atol=3e-3, rtol=3e-3), "out_r mismatch"
    assert jnp.allclose(out_t, ref_t, atol=3e-3, rtol=3e-3), "out_t mismatch"
    print("KERNEL_OK")
</pallas_src>

<mosaic_0001>
module attributes {stable_mosaic.version = 11 : i64} {
  func.func @kernel(%arg0: i32, %arg1: memref<1x32x256xf32, #tpu.memory_space<vmem>>, %arg2: memref<1x32x256xf32, #tpu.memory_space<vmem>>, %arg3: memref<32x32xf32, #tpu.memory_space<vmem>>, %arg4: memref<32x32xf32, #tpu.memory_space<vmem>>, %arg5: memref<32x1xf32, #tpu.memory_space<vmem>>, %arg6: memref<8x32xf32, #tpu.memory_space<vmem>>, %arg7: memref<64x8xf32, #tpu.memory_space<vmem>>, %arg8: memref<256x256xbf16, #tpu.memory_space<vmem>>, %arg9: memref<256x256xbf16, #tpu.memory_space<vmem>>, %arg10: memref<256x256xbf16, #tpu.memory_space<vmem>>, %arg11: memref<256x256xbf16, #tpu.memory_space<vmem>>, %arg12: memref<2xf32, #tpu.memory_space<smem>>, %arg13: memref<1x32x256xf32, #tpu.memory_space<vmem>>, %arg14: memref<1x32x256xf32, #tpu.memory_space<vmem>>) attributes {dimension_semantics = [#tpu.dimension_semantics<parallel>], iteration_bounds = array<i64: 2>, scalar_prefetch = 0 : i64, scratch_operands = 0 : i64, tpu.core_type = #tpu.core_type<tc>, window_params = [{transform_indices = @transform_0, window_bounds = array<i64: 1, 32, 256>}, {transform_indices = @transform_1, window_bounds = array<i64: 1, 32, 256>}, {pipeline_mode = #tpu.pipeline_mode<synchronous>, transform_indices = @transform_2, window_bounds = array<i64: 32, 32>}, {pipeline_mode = #tpu.pipeline_mode<synchronous>, transform_indices = @transform_3, window_bounds = array<i64: 32, 32>}, {pipeline_mode = #tpu.pipeline_mode<synchronous>, transform_indices = @transform_4, window_bounds = array<i64: 32, 1>}, {pipeline_mode = #tpu.pipeline_mode<synchronous>, transform_indices = @transform_5, window_bounds = array<i64: 8, 32>}, {pipeline_mode = #tpu.pipeline_mode<synchronous>, transform_indices = @transform_6, window_bounds = array<i64: 64, 8>}, {pipeline_mode = #tpu.pipeline_mode<synchronous>, transform_indices = @transform_7, window_bounds = array<i64: 256, 256>}, {pipeline_mode = #tpu.pipeline_mode<synchronous>, transform_indices = @transform_8, window_bounds = array<i64: 256, 256>}, {pipeline_mode = #tpu.pipeline_mode<synchronous>, transform_indices = @transform_9, window_bounds = array<i64: 256, 256>}, {pipeline_mode = #tpu.pipeline_mode<synchronous>, transform_indices = @transform_10, window_bounds = array<i64: 256, 256>}, {transform_indices = @transform_11, window_bounds = array<i64: 2>}, {transform_indices = @transform_12, window_bounds = array<i64: 1, 32, 256>}, {transform_indices = @transform_13, window_bounds = array<i64: 1, 32, 256>}]} {
    %c0 = arith.constant 0 : index
    %c0_0 = arith.constant 0 : index
    %0 = vector.load %arg3[%c0, %c0_0] : memref<32x32xf32, #tpu.memory_space<vmem>>, vector<32x32xf32>
    %c0_1 = arith.constant 0 : index
    %c0_2 = arith.constant 0 : index
    %1 = vector.load %arg4[%c0_1, %c0_2] : memref<32x32xf32, #tpu.memory_space<vmem>>, vector<32x32xf32>
    %c0_3 = arith.constant 0 : index
    %c0_4 = arith.constant 0 : index
    %2 = vector.load %arg5[%c0_3, %c0_4] : memref<32x1xf32, #tpu.memory_space<vmem>>, vector<32x1xf32>
    %c0_5 = arith.constant 0 : index
    %c0_6 = arith.constant 0 : index
    %3 = vector.load %arg6[%c0_5, %c0_6] : memref<8x32xf32, #tpu.memory_space<vmem>>, vector<8x32xf32>
    %c0_7 = arith.constant 0 : index
    %c0_8 = arith.constant 0 : index
    %4 = vector.load %arg7[%c0_7, %c0_8] : memref<64x8xf32, #tpu.memory_space<vmem>>, vector<64x8xf32>
    %c0_9 = arith.constant 0 : index
    %c0_10 = arith.constant 0 : index
    %5 = vector.load %arg8[%c0_9, %c0_10] : memref<256x256xbf16, #tpu.memory_space<vmem>>, vector<256x256xbf16>
    %6 = arith.extf %5 : vector<256x256xbf16> to vector<256x256xf32>
    %c0_11 = arith.constant 0 : index
    %c0_12 = arith.constant 0 : index
    %7 = vector.load %arg9[%c0_11, %c0_12] : memref<256x256xbf16, #tpu.memory_space<vmem>>, vector<256x256xbf16>
    %8 = arith.extf %7 : vector<256x256xbf16> to vector<256x256xf32>
    %c0_13 = arith.constant 0 : index
    %c0_14 = arith.constant 0 : index
    %9 = vector.load %arg10[%c0_13, %c0_14] : memref<256x256xbf16, #tpu.memory_space<vmem>>, vector<256x256xbf16>
    %10 = arith.extf %9 : vector<256x256xbf16> to vector<256x256xf32>
    %c0_15 = arith.constant 0 : index
    %c0_16 = arith.constant 0 : index
    %11 = vector.load %arg11[%c0_15, %c0_16] : memref<256x256xbf16, #tpu.memory_space<vmem>>, vector<256x256xbf16>
    %12 = arith.extf %11 : vector<256x256xbf16> to vector<256x256xf32>
    %c0_17 = arith.constant 0 : index
    %13 = memref.load %arg12[%c0_17] : memref<2xf32, #tpu.memory_space<smem>>
    %c1 = arith.constant 1 : index
    %14 = memref.load %arg12[%c1] : memref<2xf32, #tpu.memory_space<smem>>
    %c0_18 = arith.constant 0 : index
    %c0_19 = arith.constant 0 : index
    %c0_20 = arith.constant 0 : index
    %15 = vector.load %arg1[%c0_18, %c0_19, %c0_20] : memref<1x32x256xf32, #tpu.memory_space<vmem>>, vector<1x32x256xf32>
    %16 = vector.shape_cast %15 : vector<1x32x256xf32> to vector<32x256xf32>
    %c0_21 = arith.constant 0 : index
    %c0_22 = arith.constant 0 : index
    %c0_23 = arith.constant 0 : index
    %17 = vector.load %arg2[%c0_21, %c0_22, %c0_23] : memref<1x32x256xf32, #tpu.memory_space<vmem>>, vector<1x32x256xf32>
    %18 = vector.shape_cast %17 : vector<1x32x256xf32> to vector<32x256xf32>
    %cst = arith.constant dense<0.000000e+00> : vector<32x256xf32>
    %19 = tpu.matmul %0, %16, %cst {dimension_numbers = #tpu.dot_dimension_numbers<[1], [0], [0], [1], [0, 0, 1, 1], [], []>} : vector<32x32xf32>, vector<32x256xf32>, vector<32x256xf32> -> vector<32x256xf32>
    %cst_24 = arith.constant dense<0.000000e+00> : vector<32x256xf32>
    %20 = tpu.matmul %1, %18, %cst_24 {dimension_numbers = #tpu.dot_dimension_numbers<[1], [0], [0], [1], [0, 0, 1, 1], [], []>} : vector<32x32xf32>, vector<32x256xf32>, vector<32x256xf32> -> vector<32x256xf32>
    %21 = arith.addf %19, %20 : vector<32x256xf32>
    %22 = vector.broadcast %2 : vector<32x1xf32> to vector<32x256xf32>
    %23 = arith.addf %21, %22 : vector<32x256xf32>
    %cst_25 = arith.constant 0.000000e+00 : f32
    %24 = vector.broadcast %cst_25 : f32 to vector<32x256xf32>
    %25 = arith.maximumf %23, %24 : vector<32x256xf32>
    %cst_26 = arith.constant dense<0xFF800000> : vector<32xf32>
    %26 = vector.multi_reduction <maximumf>, %25, %cst_26 [1] : vector<32x256xf32> to vector<32xf32>
    %27 = vector.shape_cast %26 : vector<32xf32> to vector<32x1xf32>
    %cst_27 = arith.constant dense<0.000000e+00> : vector<32xf32>
    %28 = vector.multi_reduction <add>, %25, %cst_27 [1] : vector<32x256xf32> to vector<32xf32>
    %29 = vector.shape_cast %28 : vector<32xf32> to vector<32x1xf32>
    %cst_28 = arith.constant 3.906250e-03 : f32
    %30 = vector.broadcast %cst_28 : f32 to vector<32x1xf32>
    %31 = arith.mulf %29, %30 : vector<32x1xf32>
    %32 = tpu.concatenate %27, %31 in 1 : vector<32x1xf32>, vector<32x1xf32> -> vector<32x2xf32>
    %cst_29 = arith.constant dense<0.000000e+00> : vector<8x2xf32>
    %33 = tpu.matmul %3, %32, %cst_29 {dimension_numbers = #tpu.dot_dimension_numbers<[1], [0], [0], [1], [0, 0, 1, 1], [], []>} : vector<8x32xf32>, vector<32x2xf32>, vector<8x2xf32> -> vector<8x2xf32>
    %cst_30 = arith.constant 0.000000e+00 : f32
    %34 = vector.broadcast %cst_30 : f32 to vector<8x2xf32>
    %35 = arith.maximumf %33, %34 : vector<8x2xf32>
    %cst_31 = arith.constant dense<0.000000e+00> : vector<64x2xf32>
    %36 = tpu.matmul %4, %35, %cst_31 {dimension_numbers = #tpu.dot_dimension_numbers<[1], [0], [0], [1], [0, 0, 1, 1], [], []>} : vector<64x8xf32>, vector<8x2xf32>, vector<64x2xf32> -> vector<64x2xf32>
    %cst_32 = arith.constant dense<0.000000e+00> : vector<64xf32>
    %37 = vector.multi_reduction <add>, %36, %cst_32 [1] : vector<64x2xf32> to vector<64xf32>
    %38 = vector.shape_cast %37 : vector<64xf32> to vector<64x1xf32>
    %39 = arith.negf %38 : vector<64x1xf32>
    %40 = math.exp %39 : vector<64x1xf32>
    %cst_33 = arith.constant 1.000000e+00 : f32
    %41 = vector.broadcast %cst_33 : f32 to vector<64x1xf32>
    %42 = arith.addf %41, %40 : vector<64x1xf32>
    %43 = arith.divf %41, %42 : vector<64x1xf32>
    %44 = vector.extract_strided_slice %43 {offsets = [0, 0], sizes = [32, 1], strides = [1, 1]} : vector<64x1xf32> to vector<32x1xf32>
    %45 = vector.broadcast %44 : vector<32x1xf32> to vector<32x256xf32>
    %46 = arith.mulf %45, %16 : vector<32x256xf32>
    %cst_34 = arith.constant dense<0xFF800000> : vector<256xf32>
    %47 = vector.multi_reduction <maximumf>, %46, %cst_34 [0] : vector<32x256xf32> to vector<256xf32>
    %48 = vector.shape_cast %47 : vector<256xf32> to vector<1x256xf32>
    %cst_35 = arith.constant dense<0.000000e+00> : vector<256xf32>
    %49 = vector.multi_reduction <add>, %46, %cst_35 [0] : vector<32x256xf32> to vector<256xf32>
    %50 = vector.shape_cast %49 : vector<256xf32> to vector<1x256xf32>
    %cst_36 = arith.constant 3.125000e-02 : f32
    %51 = vector.broadcast %cst_36 : f32 to vector<1x256xf32>
    %52 = arith.mulf %50, %51 : vector<1x256xf32>
    %cst_37 = arith.constant dense<0.000000e+00> : vector<1x256xf32>
    %53 = tpu.matmul %48, %6, %cst_37 {dimension_numbers = #tpu.dot_dimension_numbers<[1], [0], [0], [1], [0, 0, 1, 1], [], []>} : vector<1x256xf32>, vector<256x256xf32>, vector<1x256xf32> -> vector<1x256xf32>
    %cst_38 = arith.constant dense<0.000000e+00> : vector<1x256xf32>
    %54 = tpu.matmul %52, %8, %cst_38 {dimension_numbers = #tpu.dot_dimension_numbers<[1], [0], [0], [1], [0, 0, 1, 1], [], []>} : vector<1x256xf32>, vector<256x256xf32>, vector<1x256xf32> -> vector<1x256xf32>
    %55 = arith.addf %53, %54 : vector<1x256xf32>
    %56 = vector.broadcast %13 : f32 to vector<1x256xf32>
    %57 = arith.addf %55, %56 : vector<1x256xf32>
    %58 = arith.negf %57 : vector<1x256xf32>
    %59 = math.exp %58 : vector<1x256xf32>
    %cst_39 = arith.constant 1.000000e+00 : f32
    %60 = vector.broadcast %cst_39 : f32 to vector<1x256xf32>
    %61 = arith.addf %60, %59 : vector<1x256xf32>
    %62 = arith.divf %60, %61 : vector<1x256xf32>
    %63 = vector.broadcast %62 : vector<1x256xf32> to vector<32x256xf32>
    %64 = arith.mulf %46, %63 : vector<32x256xf32>
    %65 = arith.addf %64, %16 : vector<32x256xf32>
    %c0_40 = arith.constant 0 : index
    %c0_41 = arith.constant 0 : index
    %c0_42 = arith.constant 0 : index
    %66 = vector.load %arg13[%c0_40, %c0_41, %c0_42] : memref<1x32x256xf32, #tpu.memory_space<vmem>>, vector<1x32x256xf32>
    %67 = vector.shape_cast %66 : vector<1x32x256xf32> to vector<32x256xf32>
    %68 = vector.shape_cast %65 : vector<32x256xf32> to vector<1x32x256xf32>
    tpu.vector_store %arg13[%c0_40, %c0_41, %c0_42], %68 {strides = array<i32>} : memref<1x32x256xf32, #tpu.memory_space<vmem>>, vector<1x32x256xf32>,
    %69 = vector.extract_strided_slice %43 {offsets = [32, 0], sizes = [32, 1], strides = [1, 1]} : vector<64x1xf32> to vector<32x1xf32>
    %70 = vector.broadcast %69 : vector<32x1xf32> to vector<32x256xf32>
    %71 = arith.mulf %70, %18 : vector<32x256xf32>
    %cst_43 = arith.constant dense<0xFF800000> : vector<256xf32>
    %72 = vector.multi_reduction <maximumf>, %71, %cst_43 [0] : vector<32x256xf32> to vector<256xf32>
    %73 = vector.shape_cast %72 : vector<256xf32> to vector<1x256xf32>
    %cst_44 = arith.constant dense<0.000000e+00> : vector<256xf32>
    %74 = vector.multi_reduction <add>, %71, %cst_44 [0] : vector<32x256xf32> to vector<256xf32>
    %75 = vector.shape_cast %74 : vector<256xf32> to vector<1x256xf32>
    %cst_45 = arith.constant 3.125000e-02 : f32
    %76 = vector.broadcast %cst_45 : f32 to vector<1x256xf32>
    %77 = arith.mulf %75, %76 : vector<1x256xf32>
    %cst_46 = arith.constant dense<0.000000e+00> : vector<1x256xf32>
    %78 = tpu.matmul %73, %10, %cst_46 {dimension_numbers = #tpu.dot_dimension_numbers<[1], [0], [0], [1], [0, 0, 1, 1], [], []>} : vector<1x256xf32>, vector<256x256xf32>, vector<1x256xf32> -> vector<1x256xf32>
    %cst_47 = arith.constant dense<0.000000e+00> : vector<1x256xf32>
    %79 = tpu.matmul %77, %12, %cst_47 {dimension_numbers = #tpu.dot_dimension_numbers<[1], [0], [0], [1], [0, 0, 1, 1], [], []>} : vector<1x256xf32>, vector<256x256xf32>, vector<1x256xf32> -> vector<1x256xf32>
    %80 = arith.addf %78, %79 : vector<1x256xf32>
    %81 = vector.broadcast %14 : f32 to vector<1x256xf32>
    %82 = arith.addf %80, %81 : vector<1x256xf32>
    %83 = arith.negf %82 : vector<1x256xf32>
    %84 = math.exp %83 : vector<1x256xf32>
    %cst_48 = arith.constant 1.000000e+00 : f32
    %85 = vector.broadcast %cst_48 : f32 to vector<1x256xf32>
    %86 = arith.addf %85, %84 : vector<1x256xf32>
    %87 = arith.divf %85, %86 : vector<1x256xf32>
    %88 = vector.broadcast %87 : vector<1x256xf32> to vector<32x256xf32>
    %89 = arith.mulf %71, %88 : vector<32x256xf32>
    %90 = arith.addf %89, %18 : vector<32x256xf32>
    %c0_49 = arith.constant 0 : index
    %c0_50 = arith.constant 0 : index
    %c0_51 = arith.constant 0 : index
    %91 = vector.load %arg14[%c0_49, %c0_50, %c0_51] : memref<1x32x256xf32, #tpu.memory_space<vmem>>, vector<1x32x256xf32>
    %92 = vector.shape_cast %91 : vector<1x32x256xf32> to vector<32x256xf32>
    %93 = vector.shape_cast %90 : vector<32x256xf32> to vector<1x32x256xf32>
    tpu.vector_store %arg14[%c0_49, %c0_50, %c0_51], %93 {strides = array<i32>} : memref<1x32x256xf32, #tpu.memory_space<vmem>>, vector<1x32x256xf32>,
    return
  }
  func.func @transform_0(%arg0: i32) -> (i32, i32, i32) {
    %c0_i32 = arith.constant 0 : i32
    %c0_i32_0 = arith.constant 0 : i32
    %c0_i32_1 = arith.constant 0 : i32
    return %arg0, %c0_i32, %c0_i32_0 : i32, i32, i32
  }
  func.func @transform_1(%arg0: i32) -> (i32, i32, i32) {
    %c0_i32 = arith.constant 0 : i32
    %c0_i32_0 = arith.constant 0 : i32
    %c0_i32_1 = arith.constant 0 : i32
    return %arg0, %c0_i32, %c0_i32_0 : i32, i32, i32
  }
  func.func @transform_2(%arg0: i32) -> (i32, i32) {
    %c0_i32 = arith.constant 0 : i32
    %c0_i32_0 = arith.constant 0 : i32
    %c0_i32_1 = arith.constant 0 : i32
    return %c0_i32, %c0_i32_0 : i32, i32
  }
  func.func @transform_3(%arg0: i32) -> (i32, i32) {
    %c0_i32 = arith.constant 0 : i32
    %c0_i32_0 = arith.constant 0 : i32
    %c0_i32_1 = arith.constant 0 : i32
    return %c0_i32, %c0_i32_0 : i32, i32
  }
  func.func @transform_4(%arg0: i32) -> (i32, i32) {
    %c0_i32 = arith.constant 0 : i32
    %c0_i32_0 = arith.constant 0 : i32
    %c0_i32_1 = arith.constant 0 : i32
    return %c0_i32, %c0_i32_0 : i32, i32
  }
  func.func @transform_5(%arg0: i32) -> (i32, i32) {
    %c0_i32 = arith.constant 0 : i32
    %c0_i32_0 = arith.constant 0 : i32
    %c0_i32_1 = arith.constant 0 : i32
    return %c0_i32, %c0_i32_0 : i32, i32
  }
  func.func @transform_6(%arg0: i32) -> (i32, i32) {
    %c0_i32 = arith.constant 0 : i32
    %c0_i32_0 = arith.constant 0 : i32
    %c0_i32_1 = arith.constant 0 : i32
    return %c0_i32, %c0_i32_0 : i32, i32
  }
  func.func @transform_7(%arg0: i32) -> (i32, i32) {
    %c0_i32 = arith.constant 0 : i32
    %c0_i32_0 = arith.constant 0 : i32
    %c0_i32_1 = arith.constant 0 : i32
    return %c0_i32, %c0_i32_0 : i32, i32
  }
  func.func @transform_8(%arg0: i32) -> (i32, i32) {
    %c0_i32 = arith.constant 0 : i32
    %c0_i32_0 = arith.constant 0 : i32
    %c0_i32_1 = arith.constant 0 : i32
    return %c0_i32, %c0_i32_0 : i32, i32
  }
  func.func @transform_9(%arg0: i32) -> (i32, i32) {
    %c0_i32 = arith.constant 0 : i32
    %c0_i32_0 = arith.constant 0 : i32
    %c0_i32_1 = arith.constant 0 : i32
    return %c0_i32, %c0_i32_0 : i32, i32
  }
  func.func @transform_10(%arg0: i32) -> (i32, i32) {
    %c0_i32 = arith.constant 0 : i32
    %c0_i32_0 = arith.constant 0 : i32
    %c0_i32_1 = arith.constant 0 : i32
    return %c0_i32, %c0_i32_0 : i32, i32
  }
  func.func @transform_11(%arg0: i32) -> i32 {
    %c0_i32 = arith.constant 0 : i32
    %c0_i32_0 = arith.constant 0 : i32
    return %c0_i32 : i32
  }
  func.func @transform_12(%arg0: i32) -> (i32, i32, i32) {
    %c0_i32 = arith.constant 0 : i32
    %c0_i32_0 = arith.constant 0 : i32
    %c0_i32_1 = arith.constant 0 : i32
    return %arg0, %c0_i32, %c0_i32_0 : i32, i32, i32
  }
  func.func @transform_13(%arg0: i32) -> (i32, i32, i32) {
    %c0_i32 = arith.constant 0 : i32
    %c0_i32_0 = arith.constant 0 : i32
    %c0_i32_1 = arith.constant 0 : i32
    return %arg0, %c0_i32, %c0_i32_0 : i32, i32, i32
  }
}

</mosaic_0001>

<llo_original>
// kernel: tpu_custom_call.1
$region0: #{tpu_custom_call.1}
  #allocation0 [shape = 'u32[]', space=smem, size = 0x4, offset = 0x4, fixed_abs, tag = 'smem constant byte address 0x4 - core index']
  #allocation1 [shape = 'u32[72,128]{1,0:T(1,128)}', space=vmem, size = 0x9000, scoped, tag = 'internal scratch']
  %s0 = inlined_call_operand.hbm [shape: f32[2,32,256], index: 0, kind: input, shape index: {}]
  %s1 = inlined_call_operand.hbm [shape: f32[2,32,256], index: 1, kind: input, shape index: {}]
  %s2 = inlined_call_operand.vmem [shape: f32[32,32], index: 2, kind: input, shape index: {}]
  %s3 = inlined_call_operand.vmem [shape: f32[32,32], index: 3, kind: input, shape index: {}]
  %s4 = inlined_call_operand.vmem [shape: f32[32,1], index: 4, kind: input, shape index: {}]
  %s5 = inlined_call_operand.vmem [shape: f32[8,32], index: 5, kind: input, shape index: {}]
  %s6 = inlined_call_operand.vmem [shape: f32[64,8], index: 6, kind: input, shape index: {}]
  %s7 = inlined_call_operand.hbm [shape: bf16[256,256], index: 7, kind: input, shape index: {}]
  %s8 = inlined_call_operand.hbm [shape: bf16[256,256], index: 8, kind: input, shape index: {}]
  %s9 = inlined_call_operand.hbm [shape: bf16[256,256], index: 9, kind: input, shape index: {}]
  %s10 = inlined_call_operand.hbm [shape: bf16[256,256], index: 10, kind: input, shape index: {}]
  %s11 = inlined_call_operand.vmem [shape: f32[2], index: 11, kind: input, shape index: {}]
  %s12 = inlined_call_operand.hbm [shape: f32[2,32,256], index: 12, kind: output, shape index: {0}]
  %s13 = inlined_call_operand.hbm [shape: f32[2,32,256], index: 13, kind: output, shape index: {1}]
  %14 = xla_tuple %s12, %s13
  %s15 = sld [smem:[#allocation0]]
  $region117: #{tpu_custom_call.1} parent=0
    _
  %s17 = ssub.s32 1, %s15
  %s18 = scalar_select 0, %s17, %s15
  $region1: #{tpu_custom_call.1} parent=0
    #allocation2 [shape = 'u8[65536]{0}', space=vmem, size = 0x10000, scoped, tag = 'input window, operand 0']
    #allocation3 [shape = 's32[2]{0}', space=sflag, size = 0x8, scoped, tag = 'scoped memory for tpu_custom_call.1']
    #allocation4 [shape = 's32[2]{0}', space=sflag, size = 0x8, scoped, tag = 'scoped memory for tpu_custom_call.1']
    #allocation5 [shape = 's32[2]{0}', space=sflag, size = 0x8, scoped, tag = 'scoped memory for tpu_custom_call.1']
    #allocation6 [shape = 'u8[65536]{0}', space=vmem, size = 0x10000, scoped, tag = 'input window, operand 1']
    #allocation7 [shape = 's32[2]{0}', space=sflag, size = 0x8, scoped, tag = 'scoped memory for tpu_custom_call.1']
    #allocation8 [shape = 'u8[131072]{0}', space=vmem, size = 0x20000, scoped, tag = 'input window, operand 7, single buffered']
    #allocation9 [shape = 'u8[131072]{0}', space=vmem, size = 0x20000, scoped, tag = 'input window, operand 8, single buffered']
    #allocation10 [shape = 's32[1]{0}', space=sflag, size = 0x4, scoped, tag = 'scoped memory for tpu_custom_call.1']
    #allocation11 [shape = 'u8[131072]{0}', space=vmem, size = 0x20000, scoped, tag = 'input window, operand 9, single buffered']
    #allocation12 [shape = 'u8[131072]{0}', space=vmem, size = 0x20000, scoped, tag = 'input window, operand 10, single buffered']
    #allocation13 [shape = 's32[1]{0}', space=sflag, size = 0x4, scoped, tag = 'scoped memory for tpu_custom_call.1']
    #allocation14 [shape = 'u8[512]{0}', space=smem, size = 0x200, scoped, tag = 'input window, operand 11, single buffered']
    #allocation15 [shape = 'u8[65536]{0}', space=vmem, size = 0x10000, scoped, tag = 'output window, operand 0']
    #allocation16 [shape = 'u8[65536]{0}', space=vmem, size = 0x10000, scoped, tag = 'output window, operand 1']
    #allocation17 [shape = 's32[2]{0}', space=sflag, size = 0x8, scoped, tag = 'scoped memory for tpu_custom_call.1']
    %19 = vsyncpa [#allocation3], 0
    %s20 = scalar_lea.sflag [#allocation3], 1
    %21 = vsyncpa %s20, 0
    %22 = vsyncpa [#allocation7], 0
    %s23 = scalar_lea.sflag [#allocation7], 1
    %24 = vsyncpa %s23, 0
    %25 = vsyncpa [#allocation10], 0
    %26 = vsyncpa [#allocation13], 0
    %27 = vsyncpa [#allocation5], 0
    %28 = vsyncpa [#allocation4], 0
    %s29 = scalar_lea.sflag [#allocation4], 1
    %30 = vsyncpa %s29, 0
    %31 = vsyncpa [#allocation17], 0
    %s32 = scalar_lea.sflag [#allocation17], 1
    %33 = vsyncpa %s32, 0
    loop: start=0, step=1, limit=4
    $region2: #{tpu_custom_call.1} parent=1 // loop_pre_header
      _
    $region3: #{tpu_custom_call.1} parent=1 // loop_header
      %s35 = sphi 0, %s39
      %p36 = scmp.ge.s32.totalorder %s35, 4
      %s45 = sphi 0, %s47
      %s48 = sphi 0, %s45
      %s49 = sphi 0, %s48
      %s65 = sphi 0, %s49
      %s71 = sphi 0, %s73
      %s74 = sphi 0, %s71
      %s75 = sphi 0, %s74
      %s91 = sphi 0, %s75
      %s95 = sphi 0, %s95
      %s97 = sphi 0, %s95
      %s98 = sphi 0, %s97
      %s112 = sphi 0, %s98
      %s116 = sphi 0, %s116
      %s118 = sphi 0, %s116
      %s119 = sphi 0, %s118
      %s133 = sphi 0, %s119
      %s137 = sphi 0, %s137
      %s139 = sphi 0, %s137
      %s140 = sphi 0, %s139
      %s154 = sphi 0, %s140
      %s158 = sphi 0, %s158
      %s160 = sphi 0, %s158
      %s161 = sphi 0, %s160
      %s175 = sphi 0, %s161
      %s179 = sphi 0, %s179
      %s181 = sphi 0, %s179
      %s182 = sphi 0, %s181
      %s196 = sphi 0, %s182
      %s200 = sphi 0, %s200
      %s202 = sphi 0, %s200
      %s203 = sphi 0, %s202
      %s217 = sphi 0, %s203
      %s221 = sphi 0, %s221
      %s223 = sphi 0, %s221
      %s224 = sphi 0, %s223
      %s238 = sphi 0, %s224
      %s242 = sphi 0, %s242
      %s244 = sphi 0, %s242
      %s245 = sphi 0, %s244
      %s259 = sphi 0, %s245
      %s263 = sphi 0, %s263
      %s265 = sphi 0, %s263
      %s266 = sphi 0, %s265
      %s280 = sphi 0, %s266
      %s284 = sphi 0, %s284
      %s286 = sphi 0, %s284
      %s287 = sphi 0, %s286
      %s301 = sphi 0, %s287
      %s307 = sphi 0, %s309
      %s310 = sphi 0, %s307
      %s311 = sphi 0, %s310
      %s327 = sphi 0, %s311
      %s333 = sphi 0, %s335
      %s336 = sphi 0, %s333
      %s337 = sphi 0, %s336
      %s353 = sphi 0, %s337
    $region4: #{tpu_custom_call.1} parent=1 // loop_header_branch
      %38 = sbr.rel (%p36) target = $region8
    $region5: #{tpu_custom_call.1} parent=1 // loop_body
      %s40 = ssub.s32 %s35, 1
      %s41 = ssub.s32 %s35, 2
      %s42 = sadd.s32 %s35, 1
      %s43 = ssub.s32 %s35, %s42
      %p44 = scmp.eq.s32.totalorder %s43, 0
      %s46 = sadd.s32 %s45, 1
      %s47 = scalar_select %p44, %s45, %s46
      %p50 = pneg %p44
      %p51 = scmp.eq.s32.totalorder %s35, 1
      %p52 = por %p50, %p51
      %p53 = scmp.ne.s32.totalorder %s45, %s48
      %p54 = scmp.eq.s32.totalorder %s35, 0
      %p55 = por %p53, %p54
      %p56 = scmp.ne.s32.totalorder %s45, %s48
      %p57 = scmp.eq.s32.totalorder %s40, 1
      %p58 = por %p56, %p57
      %p59 = scmp.ne.s32.totalorder %s48, %s49
      %p60 = scmp.eq.s32.totalorder %s40, 0
      %p61 = por %p59, %p60
      %p62 = scmp.ne.s32.totalorder %s48, %s49
      %p63 = scmp.eq.s32.totalorder %s41, 1
      %p64 = por %p62, %p63
      %p66 = scmp.ne.s32.totalorder %s49, %s65
      %p67 = scmp.eq.s32.totalorder %s41, 0
      %p68 = por %p66, %p67
      %s69 = ssub.s32 %s35, %s42
      %p70 = scmp.eq.s32.totalorder %s69, 0
      %s72 = sadd.s32 %s71, 1
      %s73 = scalar_select %p70, %s71, %s72
      %p76 = pneg %p70
      %p77 = scmp.eq.s32.totalorder %s35, 1
      %p78 = por %p76, %p77
      %p79 = scmp.ne.s32.totalorder %s71, %s74
      %p80 = scmp.eq.s32.totalorder %s35, 0
      %p81 = por %p79, %p80
      %p82 = scmp.ne.s32.totalorder %s71, %s74
      %p83 = scmp.eq.s32.totalorder %s40, 1
      %p84 = por %p82, %p83
      %p85 = scmp.ne.s32.totalorder %s74, %s75
      %p86 = scmp.eq.s32.totalorder %s40, 0
      %p87 = por %p85, %p86
      %p88 = scmp.ne.s32.totalorder %s74, %s75
      %p89 = scmp.eq.s32.totalorder %s41, 1
      %p90 = por %p88, %p89
      %p92 = scmp.ne.s32.totalorder %s75, %s91
      %p93 = scmp.eq.s32.totalorder %s41, 0
      %p94 = por %p92, %p93
      %s96 = sadd.s32 %s95, 1
      %p99 = scmp.eq.s32.totalorder %s35, 1
      %p100 = scmp.ne.s32.totalorder %s95, %s97
      %p101 = scmp.eq.s32.totalorder %s35, 0
      %p102 = por %p100, %p101
      %p103 = scmp.ne.s32.totalorder %s95, %s97
      %p104 = scmp.eq.s32.totalorder %s40, 1
      %p105 = por %p103, %p104
      %p106 = scmp.ne.s32.totalorder %s97, %s98
      %p107 = scmp.eq.s32.totalorder %s40, 0
      %p108 = por %p106, %p107
      %p109 = scmp.ne.s32.totalorder %s97, %s98
      %p110 = scmp.eq.s32.totalorder %s41, 1
      %p111 = por %p109, %p110
      %p113 = scmp.ne.s32.totalorder %s98, %s112
      %p114 = scmp.eq.s32.totalorder %s41, 0
      %p115 = por %p113, %p114
      %s117 = sadd.s32 %s116, 1
      %p120 = scmp.eq.s32.totalorder %s35, 1
      %p121 = scmp.ne.s32.totalorder %s116, %s118
      %p122 = scmp.eq.s32.totalorder %s35, 0
      %p123 = por %p121, %p122
      %p124 = scmp.ne.s32.totalorder %s116, %s118
      %p125 = scmp.eq.s32.totalorder %s40, 1
      %p126 = por %p124, %p125
      %p127 = scmp.ne.s32.totalorder %s118, %s119
      %p128 = scmp.eq.s32.totalorder %s40, 0
      %p129 = por %p127, %p128
      %p130 = scmp.ne.s32.totalorder %s118, %s119
      %p131 = scmp.eq.s32.totalorder %s41, 1
      %p132 = por %p130, %p131
      %p134 = scmp.ne.s32.totalorder %s119, %s133
      %p135 = scmp.eq.s32.totalorder %s41, 0
      %p136 = por %p134, %p135
      %s138 = sadd.s32 %s137, 1
      %p141 = scmp.eq.s32.totalorder %s35, 1
      %p142 = scmp.ne.s32.totalorder %s137, %s139
      %p143 = scmp.eq.s32.totalorder %s35, 0
      %p144 = por %p142, %p143
      %p145 = scmp.ne.s32.totalorder %s137, %s139
      %p146 = scmp.eq.s32.totalorder %s40, 1
      %p147 = por %p145, %p146
      %p148 = scmp.ne.s32.totalorder %s139, %s140
      %p149 = scmp.eq.s32.totalorder %s40, 0
      %p150 = por %p148, %p149
      %p151 = scmp.ne.s32.totalorder %s139, %s140
      %p152 = scmp.eq.s32.totalorder %s41, 1
      %p153 = por %p151, %p152
      %p155 = scmp.ne.s32.totalorder %s140, %s154
      %p156 = scmp.eq.s32.totalorder %s41, 0
      %p157 = por %p155, %p156
      %s159 = sadd.s32 %s158, 1
      %p162 = scmp.eq.s32.totalorder %s35, 1
      %p163 = scmp.ne.s32.totalorder %s158, %s160
      %p164 = scmp.eq.s32.totalorder %s35, 0
      %p165 = por %p163, %p164
      %p166 = scmp.ne.s32.totalorder %s158, %s160
      %p167 = scmp.eq.s32.totalorder %s40, 1
      %p168 = por %p166, %p167
      %p169 = scmp.ne.s32.totalorder %s160, %s161
      %p170 = scmp.eq.s32.totalorder %s40, 0
      %p171 = por %p169, %p170
      %p172 = scmp.ne.s32.totalorder %s160, %s161
      %p173 = scmp.eq.s32.totalorder %s41, 1
      %p174 = por %p172, %p173
      %p176 = scmp.ne.s32.totalorder %s161, %s175
      %p177 = scmp.eq.s32.totalorder %s41, 0
      %p178 = por %p176, %p177
      %s180 = sadd.s32 %s179, 1
      %p183 = scmp.eq.s32.totalorder %s35, 1
      %p184 = scmp.ne.s32.totalorder %s179, %s181
      %p185 = scmp.eq.s32.totalorder %s35, 0
      %p186 = por %p184, %p185
      %p187 = scmp.ne.s32.totalorder %s179, %s181
      %p188 = scmp.eq.s32.totalorder %s40, 1
      %p189 = por %p187, %p188
      %p190 = scmp.ne.s32.totalorder %s181, %s182
      %p191 = scmp.eq.s32.totalorder %s40, 0
      %p192 = por %p190, %p191
      %p193 = scmp.ne.s32.totalorder %s181, %s182
      %p194 = scmp.eq.s32.totalorder %s41, 1
      %p195 = por %p193, %p194
      %p197 = scmp.ne.s32.totalorder %s182, %s196
      %p198 = scmp.eq.s32.totalorder %s41, 0
      %p199 = por %p197, %p198
      %s201 = sadd.s32 %s200, 1
      %p204 = scmp.eq.s32.totalorder %s35, 1
      %p205 = scmp.ne.s32.totalorder %s200, %s202
      %p206 = scmp.eq.s32.totalorder %s35, 0
      %p207 = por %p205, %p206
      %p208 = scmp.ne.s32.totalorder %s200, %s202
      %p209 = scmp.eq.s32.totalorder %s40, 1
      %p210 = por %p208, %p209
      %p211 = scmp.ne.s32.totalorder %s202, %s203
      %p212 = scmp.eq.s32.totalorder %s40, 0
      %p213 = por %p211, %p212
      %p214 = scmp.ne.s32.totalorder %s202, %s203
      %p215 = scmp.eq.s32.totalorder %s41, 1
      %p216 = por %p214, %p215
      %p218 = scmp.ne.s32.totalorder %s203, %s217
      %p219 = scmp.eq.s32.totalorder %s41, 0
      %p220 = por %p218, %p219
      %s222 = sadd.s32 %s221, 1
      %p225 = scmp.eq.s32.totalorder %s35, 1
      %p226 = scmp.ne.s32.totalorder %s221, %s223
      %p227 = scmp.eq.s32.totalorder %s35, 0
      %p228 = por %p226, %p227
      %p229 = scmp.ne.s32.totalorder %s221, %s223
      %p230 = scmp.eq.s32.totalorder %s40, 1
      %p231 = por %p229, %p230
      %p232 = scmp.ne.s32.totalorder %s223, %s224
      %p233 = scmp.eq.s32.totalorder %s40, 0
      %p234 = por %p232, %p233
      %p235 = scmp.ne.s32.totalorder %s223, %s224
      %p236 = scmp.eq.s32.totalorder %s41, 1
      %p237 = por %p235, %p236
      %p239 = scmp.ne.s32.totalorder %s224, %s238
      %p240 = scmp.eq.s32.totalorder %s41, 0
      %p241 = por %p239, %p240
      %s243 = sadd.s32 %s242, 1
      %p246 = scmp.eq.s32.totalorder %s35, 1
      %p247 = scmp.ne.s32.totalorder %s242, %s244
      %p248 = scmp.eq.s32.totalorder %s35, 0
      %p249 = por %p247, %p248
      %p250 = scmp.ne.s32.totalorder %s242, %s244
      %p251 = scmp.eq.s32.totalorder %s40, 1
      %p252 = por %p250, %p251
      %p253 = scmp.ne.s32.totalorder %s244, %s245
      %p254 = scmp.eq.s32.totalorder %s40, 0
      %p255 = por %p253, %p254
      %p256 = scmp.ne.s32.totalorder %s244, %s245
      %p257 = scmp.eq.s32.totalorder %s41, 1
      %p258 = por %p256, %p257
      %p260 = scmp.ne.s32.totalorder %s245, %s259
      %p261 = scmp.eq.s32.totalorder %s41, 0
      %p262 = por %p260, %p261
      %s264 = sadd.s32 %s263, 1
      %p267 = scmp.eq.s32.totalorder %s35, 1
      %p268 = scmp.ne.s32.totalorder %s263, %s265
      %p269 = scmp.eq.s32.totalorder %s35, 0
      %p270 = por %p268, %p269
      %p271 = scmp.ne.s32.totalorder %s263, %s265
      %p272 = scmp.eq.s32.totalorder %s40, 1
      %p273 = por %p271, %p272
      %p274 = scmp.ne.s32.totalorder %s265, %s266
      %p275 = scmp.eq.s32.totalorder %s40, 0
      %p276 = por %p274, %p275
      %p277 = scmp.ne.s32.totalorder %s265, %s266
      %p278 = scmp.eq.s32.totalorder %s41, 1
      %p279 = por %p277, %p278
      %p281 = scmp.ne.s32.totalorder %s266, %s280
      %p282 = scmp.eq.s32.totalorder %s41, 0
      %p283 = por %p281, %p282
      %s285 = sadd.s32 %s284, 1
      %p288 = scmp.eq.s32.totalorder %s35, 1
      %p289 = scmp.ne.s32.totalorder %s284, %s286
      %p290 = scmp.eq.s32.totalorder %s35, 0
      %p291 = por %p289, %p290
      %p292 = scmp.ne.s32.totalorder %s284, %s286
      %p293 = scmp.eq.s32.totalorder %s40, 1
      %p294 = por %p292, %p293
      %p295 = scmp.ne.s32.totalorder %s286, %s287
      %p296 = scmp.eq.s32.totalorder %s40, 0
      %p297 = por %p295, %p296
      %p298 = scmp.ne.s32.totalorder %s286, %s287
      %p299 = scmp.eq.s32.totalorder %s41, 1
      %p300 = por %p298, %p299
      %p302 = scmp.ne.s32.totalorder %s287, %s301
      %p303 = scmp.eq.s32.totalorder %s41, 0
      %p304 = por %p302, %p303
      %s305 = ssub.s32 %s35, %s42
      %p306 = scmp.eq.s32.totalorder %s305, 0
      %s308 = sadd.s32 %s307, 1
      %s309 = scalar_select %p306, %s307, %s308
      %p312 = pneg %p306
      %p313 = scmp.eq.s32.totalorder %s35, 1
      %p314 = por %p312, %p313
      %p315 = scmp.ne.s32.totalorder %s307, %s310
      %p316 = scmp.eq.s32.totalorder %s35, 0
      %p317 = por %p315, %p316
      %p318 = scmp.ne.s32.totalorder %s307, %s310
      %p319 = scmp.eq.s32.totalorder %s40, 1
      %p320 = por %p318, %p319
      %p321 = scmp.ne.s32.totalorder %s310, %s311
      %p322 = scmp.eq.s32.totalorder %s40, 0
      %p323 = por %p321, %p322
      %p324 = scmp.ne.s32.totalorder %s310, %s311
      %p325 = scmp.eq.s32.totalorder %s41, 1
      %p326 = por %p324, %p325
      %p328 = scmp.ne.s32.totalorder %s311, %s327
      %p329 = scmp.eq.s32.totalorder %s41, 0
      %p330 = por %p328, %p329
      %s331 = ssub.s32 %s35, %s42
      %p332 = scmp.eq.s32.totalorder %s331, 0
      %s334 = sadd.s32 %s333, 1
      %s335 = scalar_select %p332, %s333, %s334
      %p338 = pneg %p332
      %p339 = scmp.eq.s32.totalorder %s35, 1
      %p340 = por %p338, %p339
      %p341 = scmp.ne.s32.totalorder %s333, %s336
      %p342 = scmp.eq.s32.totalorder %s35, 0
      %p343 = por %p341, %p342
      %p344 = scmp.ne.s32.totalorder %s333, %s336
      %p345 = scmp.eq.s32.totalorder %s40, 1
      %p346 = por %p344, %p345
      %p347 = scmp.ne.s32.totalorder %s336, %s337
      %p348 = scmp.eq.s32.totalorder %s40, 0
      %p349 = por %p347, %p348
      %p350 = scmp.ne.s32.totalorder %s336, %s337
      %p351 = scmp.eq.s32.totalorder %s41, 1
      %p352 = por %p350, %p351
      %p354 = scmp.ne.s32.totalorder %s337, %s353
      %p355 = scmp.eq.s32.totalorder %s41, 0
      %p356 = por %p354, %p355
      %p357 = scmp.le.s32.totalorder 1, %s35
      %p358 = scmp.lt.s32.totalorder %s35, 3
      %p359 = pnand %p357, %p358
      %p360 = pneg %p359
      // Predicated region
      $region9: #{tpu_custom_call.1} parent=5 // pred_check
        _
      $region10: #{tpu_custom_call.1} parent=5 // pred_check_branch
        %362 = sbr.rel (%p359) target = $region12
      $region11: #{tpu_custom_call.1} parent=5 // pred_region
        %s363 = ssub.s32 %s35, 1
        // Predicated region
        $region13: #{tpu_custom_call.1} parent=11 // pred_check
          %p364 = pneg %p108
        $region14: #{tpu_custom_call.1} parent=11 // pred_check_branch
          %366 = sbr.rel (%p364) target = $region16
        $region15: #{tpu_custom_call.1} parent=11 // pred_region
          _
        $region16: #{tpu_custom_call.1} parent=11 // pred_fallthru
          _
        // Predicated region
        $region17: #{tpu_custom_call.1} parent=11 // pred_check
          %p367 = pneg %p129
        $region18: #{tpu_custom_call.1} parent=11 // pred_check_branch
          %369 = sbr.rel (%p367) target = $region20
        $region19: #{tpu_custom_call.1} parent=11 // pred_region
          _
        $region20: #{tpu_custom_call.1} parent=11 // pred_fallthru
          _
        // Predicated region
        $region21: #{tpu_custom_call.1} parent=11 // pred_check
          %p370 = pneg %p150
        $region22: #{tpu_custom_call.1} parent=11 // pred_check_branch
          %372 = sbr.rel (%p370) target = $region24
        $region23: #{tpu_custom_call.1} parent=11 // pred_region
          _
        $region24: #{tpu_custom_call.1} parent=11 // pred_fallthru
          _
        // Predicated region
        $region25: #{tpu_custom_call.1} parent=11 // pred_check
          %p373 = pneg %p171
        $region26: #{tpu_custom_call.1} parent=11 // pred_check_branch
          %375 = sbr.rel (%p373) target = $region28
        $region27: #{tpu_custom_call.1} parent=11 // pred_region
          _
        $region28: #{tpu_custom_call.1} parent=11 // pred_fallthru
          _
        // Predicated region
        $region29: #{tpu_custom_call.1} parent=11 // pred_check
          %p376 = pneg %p192
        $region30: #{tpu_custom_call.1} parent=11 // pred_check_branch
          %378 = sbr.rel (%p376) target = $region32
        $region31: #{tpu_custom_call.1} parent=11 // pred_region
          _
        $region32: #{tpu_custom_call.1} parent=11 // pred_fallthru
          _
        // Predicated region
        $region33: #{tpu_custom_call.1} parent=11 // pred_check
          %p379 = pneg %p213
        $region34: #{tpu_custom_call.1} parent=11 // pred_check_branch
          %381 = sbr.rel (%p379) target = $region36
        $region35: #{tpu_custom_call.1} parent=11 // pred_region
          %383 = vsyncadd [#allocation7], 0
          %s384 = sshll.u32 %s7, 4
          %s385 = int_to_ptr.hbm [resolvable:$true] %s384
          %s386 = sshll.u32 [#allocation8], 4
          %s387 = int_to_ptr.vmem [resolvable:$true] %s386
          %392 = dma.hbm_to_vmem [thread:$0]  %s385, 4096, %s387, [#allocation7], 128, 128, 8
        $region36: #{tpu_custom_call.1} parent=11 // pred_fallthru
          _
        // Predicated region
        $region37: #{tpu_custom_call.1} parent=11 // pred_check
          %p393 = pneg %p234
        $region38: #{tpu_custom_call.1} parent=11 // pred_check_branch
          %395 = sbr.rel (%p393) target = $region40
        $region39: #{tpu_custom_call.1} parent=11 // pred_region
          %397 = vsyncadd [#allocation10], 0
          %s398 = sshll.u32 %s8, 4
          %s399 = int_to_ptr.hbm [resolvable:$true] %s398
          %s400 = sshll.u32 [#allocation9], 4
          %s401 = int_to_ptr.vmem [resolvable:$true] %s400
          %406 = dma.hbm_to_vmem [thread:$0]  %s399, 4096, %s401, [#allocation10], 128, 128, 8
        $region40: #{tpu_custom_call.1} parent=11 // pred_fallthru
          _
        // Predicated region
        $region41: #{tpu_custom_call.1} parent=11 // pred_check
          %p407 = pneg %p255
        $region42: #{tpu_custom_call.1} parent=11 // pred_check_branch
          %409 = sbr.rel (%p407) target = $region44
        $region43: #{tpu_custom_call.1} parent=11 // pred_region
          %411 = vsyncadd [#allocation10], 0
          %s412 = sshll.u32 %s9, 4
          %s413 = int_to_ptr.hbm [resolvable:$true] %s412
          %s414 = sshll.u32 [#allocation11], 4
          %s415 = int_to_ptr.vmem [resolvable:$true] %s414
          %420 = dma.hbm_to_vmem [thread:$0]  %s413, 4096, %s415, [#allocation10], 128, 128, 8
        $region44: #{tpu_custom_call.1} parent=11 // pred_fallthru
          _
        // Predicated region
        $region45: #{tpu_custom_call.1} parent=11 // pred_check
          %p421 = pneg %p276
        $region46: #{tpu_custom_call.1} parent=11 // pred_check_branch
          %423 = sbr.rel (%p421) target = $region48
        $region47: #{tpu_custom_call.1} parent=11 // pred_region
          %425 = vsyncadd [#allocation13], 0
          %s426 = sshll.u32 %s10, 4
          %s427 = int_to_ptr.hbm [resolvable:$true] %s426
          %s428 = sshll.u32 [#allocation12], 4
          %s429 = int_to_ptr.vmem [resolvable:$true] %s428
          %434 = dma.hbm_to_vmem [thread:$0]  %s427, 4096, %s429, [#allocation13], 128, 128, 8
        $region48: #{tpu_custom_call.1} parent=11 // pred_fallthru
          _
        // Predicated region
        $region49: #{tpu_custom_call.1} parent=11 // pred_check
          %p435 = pneg %p297
        $region50: #{tpu_custom_call.1} parent=11 // pred_check_branch
          %437 = sbr.rel (%p435) target = $region52
        $region51: #{tpu_custom_call.1} parent=11 // pred_region
          %439 = vsyncadd [#allocation5], 0
          %s441 = sshll.u32 %s11, 4
          %s442 = int_to_ptr.vmem [resolvable:$true] %s441
          %444 = dma.vmem_to_smem %s442, 16, [#allocation14], [#allocation5]
        $region52: #{tpu_custom_call.1} parent=11 // pred_fallthru
          _
      $region12: #{tpu_custom_call.1} parent=5 // pred_fallthru
        _
      %p445 = scmp.lt.s32.totalorder %s35, 2
      // Predicated region
      $region53: #{tpu_custom_call.1} parent=5 // pred_check
        %p446 = pneg %p445
      $region54: #{tpu_custom_call.1} parent=5 // pred_check_branch
        %448 = sbr.rel (%p446) target = $region56
      $region55: #{tpu_custom_call.1} parent=5 // pred_region
        // Predicated region
        $region57: #{tpu_custom_call.1} parent=55 // pred_check
          %p449 = pneg %p55
        $region58: #{tpu_custom_call.1} parent=55 // pred_check_branch
          %451 = sbr.rel (%p449) target = $region60
        $region59: #{tpu_custom_call.1} parent=55 // pred_region
          %s452 = sand.u32 %s45, 1
          %s453 = scalar_lea.sflag [#allocation3], %s452
          %s454 = sand.u32 %s45, 1
          %s455 = smul.addr %s454, 64
          %s456 = scalar_lea.vmem [#allocation2], %s455
          %458 = vsyncadd %s453, 0
          %s459 = smul.addr %s35, 8
          %s460 = smul.addr %s459, 8
          %s461 = scalar_lea.hbm %s0, %s460
          %s462 = sshll.u32 %s461, 4
          %s463 = int_to_ptr.hbm [resolvable:$true] %s462
          %s464 = sshll.u32 %s456, 4
          %s465 = int_to_ptr.vmem [resolvable:$true] %s464
          %470 = dma.hbm_to_vmem [thread:$0]  %s463, 1024, %s465, %s453, 256, 256, 16
        $region60: #{tpu_custom_call.1} parent=55 // pred_fallthru
          _
        // Predicated region
        $region61: #{tpu_custom_call.1} parent=55 // pred_check
          %p471 = pneg %p81
        $region62: #{tpu_custom_call.1} parent=55 // pred_check_branch
          %473 = sbr.rel (%p471) target = $region64
        $region63: #{tpu_custom_call.1} parent=55 // pred_region
          %s474 = sand.u32 %s35, 1
          %s475 = scalar_lea.sflag [#allocation7], %s474
          %s476 = sand.u32 %s71, 1
          %s477 = smul.addr %s476, 64
          %s478 = scalar_lea.vmem [#allocation6], %s477
          %480 = vsyncadd %s475, 0
          %s481 = smul.addr %s35, 8
          %s482 = smul.addr %s481, 8
          %s483 = scalar_lea.hbm %s1, %s482
          %s484 = sshll.u32 %s483, 4
          %s485 = int_to_ptr.hbm [resolvable:$true] %s484
          %s486 = sshll.u32 %s478, 4
          %s487 = int_to_ptr.vmem [resolvable:$true] %s486
          %492 = dma.hbm_to_vmem [thread:$0]  %s485, 1024, %s487, %s475, 256, 256, 16
        $region64: #{tpu_custom_call.1} parent=55 // pred_fallthru
          _
      $region56: #{tpu_custom_call.1} parent=5 // pred_fallthru
        _
      %p493 = scmp.le.s32.totalorder 1, %s35
      %p494 = scmp.lt.s32.totalorder %s35, 3
      %p495 = pnand %p493, %p494
      %p496 = pneg %p495
      // Predicated region
      $region65: #{tpu_custom_call.1} parent=5 // pred_check
        _
      $region66: #{tpu_custom_call.1} parent=5 // pred_check_branch
        %498 = sbr.rel (%p495) target = $region68
      $region67: #{tpu_custom_call.1} parent=5 // pred_region
        %s499 = ssub.s32 %s35, 1
        %s500 = sand.u32 %s48, 1
        %s501 = scalar_lea.sflag [#allocation3], %s500
        %s502 = sand.u32 %s48, 1
        %s503 = smul.addr %s502, 64
        %s504 = scalar_lea.vmem [#allocation2], %s503
        // Predicated region
        $region69: #{tpu_custom_call.1} parent=67 // pred_check
          %p505 = pneg %p61
        $region70: #{tpu_custom_call.1} parent=67 // pred_check_branch
          %507 = sbr.rel (%p505) target = $region72
        $region71: #{tpu_custom_call.1} parent=67 // pred_region
          %509 = dma.done %s501, 1024
        $region72: #{tpu_custom_call.1} parent=67 // pred_fallthru
          _
        %s510 = sand.u32 %s40, 1
        %s511 = scalar_lea.sflag [#allocation7], %s510
        %s512 = sand.u32 %s74, 1
        %s513 = smul.addr %s512, 64
        %s514 = scalar_lea.vmem [#allocation6], %s513
        // Predicated region
        $region73: #{tpu_custom_call.1} parent=67 // pred_check
          %p515 = pneg %p87
        $region74: #{tpu_custom_call.1} parent=67 // pred_check_branch
          %517 = sbr.rel (%p515) target = $region76
        $region75: #{tpu_custom_call.1} parent=67 // pred_region
          %519 = dma.done %s511, 1024
        $region76: #{tpu_custom_call.1} parent=67 // pred_fallthru
          _
        // Predicated region
        $region77: #{tpu_custom_call.1} parent=67 // pred_check
          %p520 = pneg %p213
        $region78: #{tpu_custom_call.1} parent=67 // pred_check_branch
          %522 = sbr.rel (%p520) target = $region80
        $region79: #{tpu_custom_call.1} parent=67 // pred_region
          %524 = dma.done [#allocation7], 4096
        $region80: #{tpu_custom_call.1} parent=67 // pred_fallthru
          _
        // Predicated region
        $region81: #{tpu_custom_call.1} parent=67 // pred_check
          %p525 = pneg %p234
        $region82: #{tpu_custom_call.1} parent=67 // pred_check_branch
          %527 = sbr.rel (%p525) target = $region84
        $region83: #{tpu_custom_call.1} parent=67 // pred_region
          %529 = dma.done [#allocation10], 4096
        $region84: #{tpu_custom_call.1} parent=67 // pred_fallthru
          _
        // Predicated region
        $region85: #{tpu_custom_call.1} parent=67 // pred_check
          %p530 = pneg %p255
        $region86: #{tpu_custom_call.1} parent=67 // pred_check_branch
          %532 = sbr.rel (%p530) target = $region88
        $region87: #{tpu_custom_call.1} parent=67 // pred_region
          %534 = dma.done [#allocation10], 4096
        $region88: #{tpu_custom_call.1} parent=67 // pred_fallthru
          _
        // Predicated region
        $region89: #{tpu_custom_call.1} parent=67 // pred_check
          %p535 = pneg %p276
        $region90: #{tpu_custom_call.1} parent=67 // pred_check_branch
          %537 = sbr.rel (%p535) target = $region92
        $region91: #{tpu_custom_call.1} parent=67 // pred_region
          %539 = dma.done [#allocation13], 4096
        $region92: #{tpu_custom_call.1} parent=67 // pred_fallthru
          _
        // Predicated region
        $region93: #{tpu_custom_call.1} parent=67 // pred_check
          %p540 = pneg %p297
        $region94: #{tpu_custom_call.1} parent=67 // pred_check_branch
          %542 = sbr.rel (%p540) target = $region96
        $region95: #{tpu_custom_call.1} parent=67 // pred_region
          %544 = dma.done [#allocation5], 16
        $region96: #{tpu_custom_call.1} parent=67 // pred_fallthru
          _
        %545 = sfence
        %s546 = sand.u32 %s48, 1
        %s547 = scalar_lea.sflag [#allocation3], %s546
        %s548 = sand.u32 %s48, 1
        %s549 = smul.addr %s548, 64
        %s550 = scalar_lea.vmem [#allocation2], %s549
        %p551 = pneg %p61
        %p552 = pneg %p58
        %s553 = sand.u32 %s40, 1
        %s554 = scalar_lea.sflag [#allocation7], %s553
        %s555 = sand.u32 %s74, 1
        %s556 = smul.addr %s555, 64
        %s557 = scalar_lea.vmem [#allocation6], %s556
        %p558 = pneg %p87
        %p559 = pneg %p84
        %p560 = pneg %p108
        %p561 = pneg %p105
        %p562 = pneg %p129
        %p563 = pneg %p126
        %p564 = pneg %p150
        %p565 = pneg %p147
        %p566 = pneg %p171
        %p567 = pneg %p168
        %p568 = pneg %p192
        %p569 = pneg %p189
        %p570 = pneg %p213
        %p571 = pneg %p210
        %p572 = pneg %p234
        %p573 = pneg %p231
        %p574 = pneg %p255
        %p575 = pneg %p252
        %p576 = pneg %p276
        %p577 = pneg %p273
        %p578 = pneg %p297
        %p579 = pneg %p294
        %p580 = pneg %p323
        %p581 = pneg %p320
        %s582 = sand.u32 %s310, 1
        %s583 = scalar_lea.sflag [#allocation4], %s582
        %s584 = sand.u32 %s310, 1
        %s585 = smul.addr %s584, 64
        %s586 = scalar_lea.vmem [#allocation15], %s585
        %p587 = pneg %p349
        %p588 = pneg %p346
        %s589 = sand.u32 %s336, 1
        %s590 = scalar_lea.sflag [#allocation17], %s589
        %s591 = sand.u32 %s336, 1
        %s592 = smul.addr %s591, 64
        %s593 = scalar_lea.vmem [#allocation16], %s592
        %v594 = vld [vmem:[%s2] sm:$0xff]
        %v595 = vld [vmem:[%s2 + $0x8] sm:$0xff]
        %v596 = vld [vmem:[%s2 + $0x10] sm:$0xff]
        %v597 = vld [vmem:[%s2 + $0x18] sm:$0xff]
        %v598 = vld [vmem:[%s3] sm:$0xff]
        %v599 = vld [vmem:[%s3 + $0x8] sm:$0xff]
        %v600 = vld [vmem:[%s3 + $0x10] sm:$0xff]
        %v601 = vld [vmem:[%s3 + $0x18] sm:$0xff]
        %v602 = vld [vmem:[%s4] sm:$0xff]
        %v603 = vld [vmem:[%s4 + $0x8] sm:$0xff]
        %v604 = vld [vmem:[%s4 + $0x10] sm:$0xff]
        %v605 = vld [vmem:[%s4 + $0x18] sm:$0xff]
        %v606 = vld [vmem:[%s5] sm:$0xff]
        %v607 = vld [vmem:[%s6] sm:$0xff]
        %v608 = vld [vmem:[%s6 + $0x8] sm:$0xff]
        %v609 = vld [vmem:[%s6 + $0x10] sm:$0xff]
        %v610 = vld [vmem:[%s6 + $0x18] sm:$0xff]
        %v611 = vld [vmem:[%s6 + $0x20] sm:$0xff]
        %v612 = vld [vmem:[%s6 + $0x28] sm:$0xff]
        %v613 = vld [vmem:[%s6 + $0x30] sm:$0xff]
        %v614 = vld [vmem:[%s6 + $0x38] sm:$0xff]
        %v615 = vld [vmem:[#allocation8] sm:$0xff]
        %v616 = vld [vmem:[#allocation8 + $0x8] sm:$0xff]
        %v617 = vld [vmem:[#allocation8 + $0x10] sm:$0xff]
        %v618 = vld [vmem:[#allocation8 + $0x18] sm:$0xff]
        %v619 = vld [vmem:[#allocation8 + $0x20] sm:$0xff]
        %v620 = vld [vmem:[#allocation8 + $0x28] sm:$0xff]
        %v621 = vld [vmem:[#allocation8 + $0x30] sm:$0xff]
        %v622 = vld [vmem:[#allocation8 + $0x38] sm:$0xff]
        %v623 = vld [vmem:[#allocation8 + $0x40] sm:$0xff]
        %v624 = vld [vmem:[#allocation8 + $0x48] sm:$0xff]
        %v625 = vld [vmem:[#allocation8 + $0x50] sm:$0xff]
        %v626 = vld [vmem:[#allocation8 + $0x58] sm:$0xff]
        %v627 = vld [vmem:[#allocation8 + $0x60] sm:$0xff]
        %v628 = vld [vmem:[#allocation8 + $0x68] sm:$0xff]
        %v629 = vld [vmem:[#allocation8 + $0x70] sm:$0xff]
        %v630 = vld [vmem:[#allocation8 + $0x78] sm:$0xff]
        %v631 = vld [vmem:[#allocation8 + $0x80] sm:$0xff]
        %v632 = vld [vmem:[#allocation8 + $0x88] sm:$0xff]
        %v633 = vld [vmem:[#allocation8 + $0x90] sm:$0xff]
        %v634 = vld [vmem:[#allocation8 + $0x98] sm:$0xff]
        %v635 = vld [vmem:[#allocation8 + $0xa0] sm:$0xff]
        %v636 = vld [vmem:[#allocation8 + $0xa8] sm:$0xff]
        %v637 = vld [vmem:[#allocation8 + $0xb0] sm:$0xff]
        %v638 = vld [vmem:[#allocation8 + $0xb8] sm:$0xff]
        %v639 = vld [vmem:[#allocation8 + $0xc0] sm:$0xff]
        %v640 = vld [vmem:[#allocation8 + $0xc8] sm:$0xff]
        %v641 = vld [vmem:[#allocation8 + $0xd0] sm:$0xff]
        %v642 = vld [vmem:[#allocation8 + $0xd8] sm:$0xff]
        %v643 = vld [vmem:[#allocation8 + $0xe0] sm:$0xff]
        %v644 = vld [vmem:[#allocation8 + $0xe8] sm:$0xff]
        %v645 = vld [vmem:[#allocation8 + $0xf0] sm:$0xff]
        %v646 = vld [vmem:[#allocation8 + $0xf8] sm:$0xff]
        %v647 = vunpack.c.l.bf16 %v615
        %v648 = vunpack.c.h.bf16 %v615
        %v649 = vunpack.c.l.bf16 %v616
        %v650 = vunpack.c.h.bf16 %v616
        %v651 = vunpack.c.l.bf16 %v617
        %v652 = vunpack.c.h.bf16 %v617
        %v653 = vunpack.c.l.bf16 %v618
        %v654 = vunpack.c.h.bf16 %v618
        %v655 = vunpack.c.l.bf16 %v619
        %v656 = vunpack.c.h.bf16 %v619
        %v657 = vunpack.c.l.bf16 %v620
        %v658 = vunpack.c.h.bf16 %v620
        %v659 = vunpack.c.l.bf16 %v621
        %v660 = vunpack.c.h.bf16 %v621
        %v661 = vunpack.c.l.bf16 %v622
        %v662 = vunpack.c.h.bf16 %v622
        %v663 = vunpack.c.l.bf16 %v623
        %v664 = vunpack.c.h.bf16 %v623
        %v665 = vunpack.c.l.bf16 %v624
        %v666 = vunpack.c.h.bf16 %v624
        %v667 = vunpack.c.l.bf16 %v625
        %v668 = vunpack.c.h.bf16 %v625
        %v669 = vunpack.c.l.bf16 %v626
        %v670 = vunpack.c.h.bf16 %v626
        %v671 = vunpack.c.l.bf16 %v627
        %v672 = vunpack.c.h.bf16 %v627
        %v673 = vunpack.c.l.bf16 %v628
        %v674 = vunpack.c.h.bf16 %v628
        %v675 = vunpack.c.l.bf16 %v629
        %v676 = vunpack.c.h.bf16 %v629
        %v677 = vunpack.c.l.bf16 %v630
        %v678 = vunpack.c.h.bf16 %v630
        %v679 = vunpack.c.l.bf16 %v631
        %v680 = vunpack.c.h.bf16 %v631
        %v681 = vunpack.c.l.bf16 %v632
        %v682 = vunpack.c.h.bf16 %v632
        %v683 = vunpack.c.l.bf16 %v633
        %v684 = vunpack.c.h.bf16 %v633
        %v685 = vunpack.c.l.bf16 %v634
        %v686 = vunpack.c.h.bf16 %v634
        %v687 = vunpack.c.l.bf16 %v635
        %v688 = vunpack.c.h.bf16 %v635
        %v689 = vunpack.c.l.bf16 %v636
        %v690 = vunpack.c.h.bf16 %v636
        %v691 = vunpack.c.l.bf16 %v637
        %v692 = vunpack.c.h.bf16 %v637
        %v693 = vunpack.c.l.bf16 %v638
        %v694 = vunpack.c.h.bf16 %v638
        %v695 = vunpack.c.l.bf16 %v639
        %v696 = vunpack.c.h.bf16 %v639
        %v697 = vunpack.c.l.bf16 %v640
        %v698 = vunpack.c.h.bf16 %v640
        %v699 = vunpack.c.l.bf16 %v641
        %v700 = vunpack.c.h.bf16 %v641
        %v701 = vunpack.c.l.bf16 %v642
        %v702 = vunpack.c.h.bf16 %v642
        %v703 = vunpack.c.l.bf16 %v643
        %v704 = vunpack.c.h.bf16 %v643
        %v705 = vunpack.c.l.bf16 %v644
        %v706 = vunpack.c.h.bf16 %v644
        %v707 = vunpack.c.l.bf16 %v645
        %v708 = vunpack.c.h.bf16 %v645
        %v709 = vunpack.c.l.bf16 %v646
        %v710 = vunpack.c.h.bf16 %v646
        %v711 = vld [vmem:[#allocation9] sm:$0xff]
        %v712 = vld [vmem:[#allocation9 + $0x8] sm:$0xff]
        %v713 = vld [vmem:[#allocation9 + $0x10] sm:$0xff]
        %v714 = vld [vmem:[#allocation9 + $0x18] sm:$0xff]
        %v715 = vld [vmem:[#allocation9 + $0x20] sm:$0xff]
        %v716 = vld [vmem:[#allocation9 + $0x28] sm:$0xff]
        %v717 = vld [vmem:[#allocation9 + $0x30] sm:$0xff]
        %v718 = vld [vmem:[#allocation9 + $0x38] sm:$0xff]
        %v719 = vld [vmem:[#allocation9 + $0x40] sm:$0xff]
        %v720 = vld [vmem:[#allocation9 + $0x48] sm:$0xff]
        %v721 = vld [vmem:[#allocation9 + $0x50] sm:$0xff]
        %v722 = vld [vmem:[#allocation9 + $0x58] sm:$0xff]
        %v723 = vld [vmem:[#allocation9 + $0x60] sm:$0xff]
        %v724 = vld [vmem:[#allocation9 + $0x68] sm:$0xff]
        %v725 = vld [vmem:[#allocation9 + $0x70] sm:$0xff]
        %v726 = vld [vmem:[#allocation9 + $0x78] sm:$0xff]
        %v727 = vld [vmem:[#allocation9 + $0x80] sm:$0xff]
        %v728 = vld [vmem:[#allocation9 + $0x88] sm:$0xff]
        %v729 = vld [vmem:[#allocation9 + $0x90] sm:$0xff]
        %v730 = vld [vmem:[#allocation9 + $0x98] sm:$0xff]
        %v731 = vld [vmem:[#allocation9 + $0xa0] sm:$0xff]
        %v732 = vld [vmem:[#allocation9 + $0xa8] sm:$0xff]
        %v733 = vld [vmem:[#allocation9 + $0xb0] sm:$0xff]
        %v734 = vld [vmem:[#allocation9 + $0xb8] sm:$0xff]
        %v735 = vld [vmem:[#allocation9 + $0xc0] sm:$0xff]
        %v736 = vld [vmem:[#allocation9 + $0xc8] sm:$0xff]
        %v737 = vld [vmem:[#allocation9 + $0xd0] sm:$0xff]
        %v738 = vld [vmem:[#allocation9 + $0xd8] sm:$0xff]
        %v739 = vld [vmem:[#allocation9 + $0xe0] sm:$0xff]
        %v740 = vld [vmem:[#allocation9 + $0xe8] sm:$0xff]
        %v741 = vld [vmem:[#allocation9 + $0xf0] sm:$0xff]
        %v742 = vld [vmem:[#allocation9 + $0xf8] sm:$0xff]
        %v743 = vunpack.c.l.bf16 %v711
        %v744 = vunpack.c.h.bf16 %v711
        %v745 = vunpack.c.l.bf16 %v712
        %v746 = vunpack.c.h.bf16 %v712
        %v747 = vunpack.c.l.bf16 %v713
        %v748 = vunpack.c.h.bf16 %v713
        %v749 = vunpack.c.l.bf16 %v714
        %v750 = vunpack.c.h.bf16 %v714
        %v751 = vunpack.c.l.bf16 %v715
        %v752 = vunpack.c.h.bf16 %v715
        %v753 = vunpack.c.l.bf16 %v716
        %v754 = vunpack.c.h.bf16 %v716
        %v755 = vunpack.c.l.bf16 %v717
        %v756 = vunpack.c.h.bf16 %v717
        %v757 = vunpack.c.l.bf16 %v718
        %v758 = vunpack.c.h.bf16 %v718
        %v759 = vunpack.c.l.bf16 %v719
        %v760 = vunpack.c.h.bf16 %v719
        %v761 = vunpack.c.l.bf16 %v720
        %v762 = vunpack.c.h.bf16 %v720
        %v763 = vunpack.c.l.bf16 %v721
        %v764 = vunpack.c.h.bf16 %v721
        %v765 = vunpack.c.l.bf16 %v722
        %v766 = vunpack.c.h.bf16 %v722
        %v767 = vunpack.c.l.bf16 %v723
        %v768 = vunpack.c.h.bf16 %v723
        %v769 = vunpack.c.l.bf16 %v724
        %v770 = vunpack.c.h.bf16 %v724
        %v771 = vunpack.c.l.bf16 %v725
        %v772 = vunpack.c.h.bf16 %v725
        %v773 = vunpack.c.l.bf16 %v726
        %v774 = vunpack.c.h.bf16 %v726
        %v775 = vunpack.c.l.bf16 %v727
        %v776 = vunpack.c.h.bf16 %v727
        %v777 = vunpack.c.l.bf16 %v728
        %v778 = vunpack.c.h.bf16 %v728
        %v779 = vunpack.c.l.bf16 %v729
        %v780 = vunpack.c.h.bf16 %v729
        %v781 = vunpack.c.l.bf16 %v730
        %v782 = vunpack.c.h.bf16 %v730
        %v783 = vunpack.c.l.bf16 %v731
        %v784 = vunpack.c.h.bf16 %v731
        %v785 = vunpack.c.l.bf16 %v732
        %v786 = vunpack.c.h.bf16 %v732
        %v787 = vunpack.c.l.bf16 %v733
        %v788 = vunpack.c.h.bf16 %v733
        %v789 = vunpack.c.l.bf16 %v734
        %v790 = vunpack.c.h.bf16 %v734
        %v791 = vunpack.c.l.bf16 %v735
        %v792 = vunpack.c.h.bf16 %v735
        %v793 = vunpack.c.l.bf16 %v736
        %v794 = vunpack.c.h.bf16 %v736
        %v795 = vunpack.c.l.bf16 %v737
        %v796 = vunpack.c.h.bf16 %v737
        %v797 = vunpack.c.l.bf16 %v738
        %v798 = vunpack.c.h.bf16 %v738
        %v799 = vunpack.c.l.bf16 %v739
        %v800 = vunpack.c.h.bf16 %v739
        %v801 = vunpack.c.l.bf16 %v740
        %v802 = vunpack.c.h.bf16 %v740
        %v803 = vunpack.c.l.bf16 %v741
        %v804 = vunpack.c.h.bf16 %v741
        %v805 = vunpack.c.l.bf16 %v742
        %v806 = vunpack.c.h.bf16 %v742
        %v807 = vld [vmem:[#allocation11] sm:$0xff]
        %v808 = vld [vmem:[#allocation11 + $0x8] sm:$0xff]
        %v809 = vld [vmem:[#allocation11 + $0x10] sm:$0xff]
        %v810 = vld [vmem:[#allocation11 + $0x18] sm:$0xff]
        %v811 = vld [vmem:[#allocation11 + $0x20] sm:$0xff]
        %v812 = vld [vmem:[#allocation11 + $0x28] sm:$0xff]
        %v813 = vld [vmem:[#allocation11 + $0x30] sm:$0xff]
        %v814 = vld [vmem:[#allocation11 + $0x38] sm:$0xff]
        %v815 = vld [vmem:[#allocation11 + $0x40] sm:$0xff]
        %v816 = vld [vmem:[#allocation11 + $0x48] sm:$0xff]
        %v817 = vld [vmem:[#allocation11 + $0x50] sm:$0xff]
        %v818 = vld [vmem:[#allocation11 + $0x58] sm:$0xff]
        %v819 = vld [vmem:[#allocation11 + $0x60] sm:$0xff]
        %v820 = vld [vmem:[#allocation11 + $0x68] sm:$0xff]
        %v821 = vld [vmem:[#allocation11 + $0x70] sm:$0xff]
        %v822 = vld [vmem:[#allocation11 + $0x78] sm:$0xff]
        %v823 = vld [vmem:[#allocation11 + $0x80] sm:$0xff]
        %v824 = vld [vmem:[#allocation11 + $0x88] sm:$0xff]
        %v825 = vld [vmem:[#allocation11 + $0x90] sm:$0xff]
        %v826 = vld [vmem:[#allocation11 + $0x98] sm:$0xff]
        %v827 = vld [vmem:[#allocation11 + $0xa0] sm:$0xff]
        %v828 = vld [vmem:[#allocation11 + $0xa8] sm:$0xff]
        %v829 = vld [vmem:[#allocation11 + $0xb0] sm:$0xff]
        %v830 = vld [vmem:[#allocation11 + $0xb8] sm:$0xff]
        %v831 = vld [vmem:[#allocation11 + $0xc0] sm:$0xff]
        %v832 = vld [vmem:[#allocation11 + $0xc8] sm:$0xff]
        %v833 = vld [vmem:[#allocation11 + $0xd0] sm:$0xff]
        %v834 = vld [vmem:[#allocation11 + $0xd8] sm:$0xff]
        %v835 = vld [vmem:[#allocation11 + $0xe0] sm:$0xff]
        %v836 = vld [vmem:[#allocation11 + $0xe8] sm:$0xff]
        %v837 = vld [vmem:[#allocation11 + $0xf0] sm:$0xff]
        %v838 = vld [vmem:[#allocation11 + $0xf8] sm:$0xff]
        %v839 = vunpack.c.l.bf16 %v807
        %v840 = vunpack.c.h.bf16 %v807
        %v841 = vunpack.c.l.bf16 %v808
        %v842 = vunpack.c.h.bf16 %v808
        %v843 = vunpack.c.l.bf16 %v809
        %v844 = vunpack.c.h.bf16 %v809
        %v845 = vunpack.c.l.bf16 %v810
        %v846 = vunpack.c.h.bf16 %v810
        %v847 = vunpack.c.l.bf16 %v811
        %v848 = vunpack.c.h.bf16 %v811
        %v849 = vunpack.c.l.bf16 %v812
        %v850 = vunpack.c.h.bf16 %v812
        %v851 = vunpack.c.l.bf16 %v813
        %v852 = vunpack.c.h.bf16 %v813
        %v853 = vunpack.c.l.bf16 %v814
        %v854 = vunpack.c.h.bf16 %v814
        %v855 = vunpack.c.l.bf16 %v815
        %v856 = vunpack.c.h.bf16 %v815
        %v857 = vunpack.c.l.bf16 %v816
        %v858 = vunpack.c.h.bf16 %v816
        %v859 = vunpack.c.l.bf16 %v817
        %v860 = vunpack.c.h.bf16 %v817
        %v861 = vunpack.c.l.bf16 %v818
        %v862 = vunpack.c.h.bf16 %v818
        %v863 = vunpack.c.l.bf16 %v819
        %v864 = vunpack.c.h.bf16 %v819
        %v865 = vunpack.c.l.bf16 %v820
        %v866 = vunpack.c.h.bf16 %v820
        %v867 = vunpack.c.l.bf16 %v821
        %v868 = vunpack.c.h.bf16 %v821
        %v869 = vunpack.c.l.bf16 %v822
        %v870 = vunpack.c.h.bf16 %v822
        %v871 = vunpack.c.l.bf16 %v823
        %v872 = vunpack.c.h.bf16 %v823
        %v873 = vunpack.c.l.bf16 %v824
        %v874 = vunpack.c.h.bf16 %v824
        %v875 = vunpack.c.l.bf16 %v825
        %v876 = vunpack.c.h.bf16 %v825
        %v877 = vunpack.c.l.bf16 %v826
        %v878 = vunpack.c.h.bf16 %v826
        %v879 = vunpack.c.l.bf16 %v827
        %v880 = vunpack.c.h.bf16 %v827
        %v881 = vunpack.c.l.bf16 %v828
        %v882 = vunpack.c.h.bf16 %v828
        %v883 = vunpack.c.l.bf16 %v829
        %v884 = vunpack.c.h.bf16 %v829
        %v885 = vunpack.c.l.bf16 %v830
        %v886 = vunpack.c.h.bf16 %v830
        %v887 = vunpack.c.l.bf16 %v831
        %v888 = vunpack.c.h.bf16 %v831
        %v889 = vunpack.c.l.bf16 %v832
        %v890 = vunpack.c.h.bf16 %v832
        %v891 = vunpack.c.l.bf16 %v833
        %v892 = vunpack.c.h.bf16 %v833
        %v893 = vunpack.c.l.bf16 %v834
        %v894 = vunpack.c.h.bf16 %v834
        %v895 = vunpack.c.l.bf16 %v835
        %v896 = vunpack.c.h.bf16 %v835
        %v897 = vunpack.c.l.bf16 %v836
        %v898 = vunpack.c.h.bf16 %v836
        %v899 = vunpack.c.l.bf16 %v837
        %v900 = vunpack.c.h.bf16 %v837
        %v901 = vunpack.c.l.bf16 %v838
        %v902 = vunpack.c.h.bf16 %v838
        %v903 = vld [vmem:[#allocation12] sm:$0xff]
        %v904 = vld [vmem:[#allocation12 + $0x8] sm:$0xff]
        %v905 = vld [vmem:[#allocation12 + $0x10] sm:$0xff]
        %v906 = vld [vmem:[#allocation12 + $0x18] sm:$0xff]
        %v907 = vld [vmem:[#allocation12 + $0x20] sm:$0xff]
        %v908 = vld [vmem:[#allocation12 + $0x28] sm:$0xff]
        %v909 = vld [vmem:[#allocation12 + $0x30] sm:$0xff]
        %v910 = vld [vmem:[#allocation12 + $0x38] sm:$0xff]
        %v911 = vld [vmem:[#allocation12 + $0x40] sm:$0xff]
        %v912 = vld [vmem:[#allocation12 + $0x48] sm:$0xff]
        %v913 = vld [vmem:[#allocation12 + $0x50] sm:$0xff]
        %v914 = vld [vmem:[#allocation12 + $0x58] sm:$0xff]
        %v915 = vld [vmem:[#allocation12 + $0x60] sm:$0xff]
        %v916 = vld [vmem:[#allocation12 + $0x68] sm:$0xff]
        %v917 = vld [vmem:[#allocation12 + $0x70] sm:$0xff]
        %v918 = vld [vmem:[#allocation12 + $0x78] sm:$0xff]
        %v919 = vld [vmem:[#allocation12 + $0x80] sm:$0xff]
        %v920 = vld [vmem:[#allocation12 + $0x88] sm:$0xff]
        %v921 = vld [vmem:[#allocation12 + $0x90] sm:$0xff]
        %v922 = vld [vmem:[#allocation12 + $0x98] sm:$0xff]
        %v923 = vld [vmem:[#allocation12 + $0xa0] sm:$0xff]
        %v924 = vld [vmem:[#allocation12 + $0xa8] sm:$0xff]
        %v925 = vld [vmem:[#allocation12 + $0xb0] sm:$0xff]
        %v926 = vld [vmem:[#allocation12 + $0xb8] sm:$0xff]
        %v927 = vld [vmem:[#allocation12 + $0xc0] sm:$0xff]
        %v928 = vld [vmem:[#allocation12 + $0xc8] sm:$0xff]
        %v929 = vld [vmem:[#allocation12 + $0xd0] sm:$0xff]
        %v930 = vld [vmem:[#allocation12 + $0xd8] sm:$0xff]
        %v931 = vld [vmem:[#allocation12 + $0xe0] sm:$0xff]
        %v932 = vld [vmem:[#allocation12 + $0xe8] sm:$0xff]
        %v933 = vld [vmem:[#allocation12 + $0xf0] sm:$0xff]
        %v934 = vld [vmem:[#allocation12 + $0xf8] sm:$0xff]
        %v935 = vunpack.c.l.bf16 %v903
        %v936 = vunpack.c.h.bf16 %v903
        %v937 = vunpack.c.l.bf16 %v904
        %v938 = vunpack.c.h.bf16 %v904
        %v939 = vunpack.c.l.bf16 %v905
        %v940 = vunpack.c.h.bf16 %v905
        %v941 = vunpack.c.l.bf16 %v906
        %v942 = vunpack.c.h.bf16 %v906
        %v943 = vunpack.c.l.bf16 %v907
        %v944 = vunpack.c.h.bf16 %v907
        %v945 = vunpack.c.l.bf16 %v908
        %v946 = vunpack.c.h.bf16 %v908
        %v947 = vunpack.c.l.bf16 %v909
        %v948 = vunpack.c.h.bf16 %v909
        %v949 = vunpack.c.l.bf16 %v910
        %v950 = vunpack.c.h.bf16 %v910
        %v951 = vunpack.c.l.bf16 %v911
        %v952 = vunpack.c.h.bf16 %v911
        %v953 = vunpack.c.l.bf16 %v912
        %v954 = vunpack.c.h.bf16 %v912
        %v955 = vunpack.c.l.bf16 %v913
        %v956 = vunpack.c.h.bf16 %v913
        %v957 = vunpack.c.l.bf16 %v914
        %v958 = vunpack.c.h.bf16 %v914
        %v959 = vunpack.c.l.bf16 %v915
        %v960 = vunpack.c.h.bf16 %v915
        %v961 = vunpack.c.l.bf16 %v916
        %v962 = vunpack.c.h.bf16 %v916
        %v963 = vunpack.c.l.bf16 %v917
        %v964 = vunpack.c.h.bf16 %v917
        %v965 = vunpack.c.l.bf16 %v918
        %v966 = vunpack.c.h.bf16 %v918
        %v967 = vunpack.c.l.bf16 %v919
        %v968 = vunpack.c.h.bf16 %v919
        %v969 = vunpack.c.l.bf16 %v920
        %v970 = vunpack.c.h.bf16 %v920
        %v971 = vunpack.c.l.bf16 %v921
        %v972 = vunpack.c.h.bf16 %v921
        %v973 = vunpack.c.l.bf16 %v922
        %v974 = vunpack.c.h.bf16 %v922
        %v975 = vunpack.c.l.bf16 %v923
        %v976 = vunpack.c.h.bf16 %v923
        %v977 = vunpack.c.l.bf16 %v924
        %v978 = vunpack.c.h.bf16 %v924
        %v979 = vunpack.c.l.bf16 %v925
        %v980 = vunpack.c.h.bf16 %v925
        %v981 = vunpack.c.l.bf16 %v926
        %v982 = vunpack.c.h.bf16 %v926
        %v983 = vunpack.c.l.bf16 %v927
        %v984 = vunpack.c.h.bf16 %v927
        %v985 = vunpack.c.l.bf16 %v928
        %v986 = vunpack.c.h.bf16 %v928
        %v987 = vunpack.c.l.bf16 %v929
        %v988 = vunpack.c.h.bf16 %v929
        %v989 = vunpack.c.l.bf16 %v930
        %v990 = vunpack.c.h.bf16 %v930
        %v991 = vunpack.c.l.bf16 %v931
        %v992 = vunpack.c.h.bf16 %v931
        %v993 = vunpack.c.l.bf16 %v932
        %v994 = vunpack.c.h.bf16 %v932
        %v995 = vunpack.c.l.bf16 %v933
        %v996 = vunpack.c.h.bf16 %v933
        %v997 = vunpack.c.l.bf16 %v934
        %v998 = vunpack.c.h.bf16 %v934
        %s999 = sld [smem:[#allocation14]]
        %s1000 = sld [smem:[#allocation14 + $0x1]]
        %v1001 = vld [vmem:[%s504] sm:$0xff]
        %v1002 = vld [vmem:[%s504 + $0x8] sm:$0xff]
        %v1003 = vld [vmem:[%s504 + $0x10] sm:$0xff]
        %v1004 = vld [vmem:[%s504 + $0x18] sm:$0xff]
        %v1005 = vld [vmem:[%s504 + $0x20] sm:$0xff]
        %v1006 = vld [vmem:[%s504 + $0x28] sm:$0xff]
        %v1007 = vld [vmem:[%s504 + $0x30] sm:$0xff]
        %v1008 = vld [vmem:[%s504 + $0x38] sm:$0xff]
        %v1009 = vld [vmem:[%s514] sm:$0xff]
        %v1010 = vld [vmem:[%s514 + $0x8] sm:$0xff]
        %v1011 = vld [vmem:[%s514 + $0x10] sm:$0xff]
        %v1012 = vld [vmem:[%s514 + $0x18] sm:$0xff]
        %v1013 = vld [vmem:[%s514 + $0x20] sm:$0xff]
        %v1014 = vld [vmem:[%s514 + $0x28] sm:$0xff]
        %v1015 = vld [vmem:[%s514 + $0x30] sm:$0xff]
        %v1016 = vld [vmem:[%s514 + $0x38] sm:$0xff]
        %vm1017 = vcmask 261120
        %v1019 = vsel %vm1017, %v598, 0
        %v1022 = vsel %vm1017, %v599, 0
        %v1025 = vsel %vm1017, %v600, 0
        %v1028 = vsel %vm1017, %v601, 0
        %1030 = vmatpush.msra.mxu0 0.0
        %1031 = vmatpush.msra.mxu0 0.0
        %1032 = vmatpush.msra.mxu0 0.0
        %1033 = vmatpush.msra.mxu0 0.0
        %1034 = vmatpush.msra.mxu0 0.0
        %1035 = vmatpush.msra.mxu0 0.0
        %1036 = vmatpush.msra.mxu0 0.0
        %1037 = vmatpush.msra.mxu0 0.0
        %1038 = vmatpush.msra.mxu0 0.0
        %1039 = vmatpush.msra.mxu0 0.0
        %1040 = vmatpush.msra.mxu0 0.0
        %1041 = vmatpush.msra.mxu0 0.0
        %1042 = vmatpush.msra.mxu0 %v1015
        %1043 = vmatpush.msra.mxu0 %v1013
        %1044 = vmatpush.msra.mxu0 %v1011
        %1045 = vmatpush.msra.mxu0 %v1009
        %1046 = vmatmul.f32.gmra.mxu0 %v1019
        %v1047 = vpop.f32.mrf.mxu0
        %v1048 = vadd.f32 0.0, %v1047
        %1049 = vmatmul.f32.gmra.mxu0 %v1022
        %v1050 = vpop.f32.mrf.mxu0
        %v1051 = vadd.f32 0.0, %v1050
        %1052 = vmatmul.f32.gmra.mxu0 %v1025
        %v1053 = vpop.f32.mrf.mxu0
        %v1054 = vadd.f32 0.0, %v1053
        %1055 = vmatmul.f32.gmra.mxu0 %v1028
        %v1056 = vpop.f32.mrf.mxu0
        %v1057 = vadd.f32 0.0, %v1056
        %1058 = vdwg.mxu0
        %1059 = vmatpush.msra.mxu0 0.0
        %1060 = vmatpush.msra.mxu0 0.0
        %1061 = vmatpush.msra.mxu0 0.0
        %1062 = vmatpush.msra.mxu0 0.0
        %1063 = vmatpush.msra.mxu0 0.0
        %1064 = vmatpush.msra.mxu0 0.0
        %1065 = vmatpush.msra.mxu0 0.0
        %1066 = vmatpush.msra.mxu0 0.0
        %1067 = vmatpush.msra.mxu0 0.0
        %1068 = vmatpush.msra.mxu0 0.0
        %1069 = vmatpush.msra.mxu0 0.0
        %1070 = vmatpush.msra.mxu0 0.0
        %1071 = vmatpush.msra.mxu0 %v1016
        %1072 = vmatpush.msra.mxu0 %v1014
        %1073 = vmatpush.msra.mxu0 %v1012
        %1074 = vmatpush.msra.mxu0 %v1010
        %1075 = vmatmul.f32.gmra.mxu0 %v1019
        %v1076 = vpop.f32.mrf.mxu0
        %v1077 = vadd.f32 0.0, %v1076
        %1078 = vmatmul.f32.gmra.mxu0 %v1022
        %v1079 = vpop.f32.mrf.mxu0
        %v1080 = vadd.f32 0.0, %v1079
        %1081 = vmatmul.f32.gmra.mxu0 %v1025
        %v1082 = vpop.f32.mrf.mxu0
        %v1083 = vadd.f32 0.0, %v1082
        %1084 = vmatmul.f32.gmra.mxu0 %v1028
        %v1085 = vpop.f32.mrf.mxu0
        %v1086 = vadd.f32 0.0, %v1085
        %1087 = vdwg.mxu0
        %v1089 = vsel %vm1017, %v594, 0
        %v1092 = vsel %vm1017, %v595, 0
        %v1095 = vsel %vm1017, %v596, 0
        %v1098 = vsel %vm1017, %v597, 0
        %1100 = vmatpush.msra.mxu0 0.0
        %1101 = vmatpush.msra.mxu0 0.0
        %1102 = vmatpush.msra.mxu0 0.0
        %1103 = vmatpush.msra.mxu0 0.0
        %1104 = vmatpush.msra.mxu0 0.0
        %1105 = vmatpush.msra.mxu0 0.0
        %1106 = vmatpush.msra.mxu0 0.0
        %1107 = vmatpush.msra.mxu0 0.0
        %1108 = vmatpush.msra.mxu0 0.0
        %1109 = vmatpush.msra.mxu0 0.0
        %1110 = vmatpush.msra.mxu0 0.0
        %1111 = vmatpush.msra.mxu0 0.0
        %1112 = vmatpush.msra.mxu0 %v1007
        %1113 = vmatpush.msra.mxu0 %v1005
        %1114 = vmatpush.msra.mxu0 %v1003
        %1115 = vmatpush.msra.mxu0 %v1001
        %1116 = vmatmul.f32.gmra.mxu0 %v1089
        %v1117 = vpop.f32.mrf.mxu0
        %v1118 = vadd.f32 %v1048, %v1117
        %1119 = vmatmul.f32.gmra.mxu0 %v1092
        %v1120 = vpop.f32.mrf.mxu0
        %v1121 = vadd.f32 %v1051, %v1120
        %1122 = vmatmul.f32.gmra.mxu0 %v1095
        %v1123 = vpop.f32.mrf.mxu0
        %v1124 = vadd.f32 %v1054, %v1123
        %1125 = vmatmul.f32.gmra.mxu0 %v1098
        %v1126 = vpop.f32.mrf.mxu0
        %v1127 = vadd.f32 %v1057, %v1126
        %1128 = vdwg.mxu0
        %1129 = vmatpush.msra.mxu0 0.0
        %1130 = vmatpush.msra.mxu0 0.0
        %1131 = vmatpush.msra.mxu0 0.0
        %1132 = vmatpush.msra.mxu0 0.0
        %1133 = vmatpush.msra.mxu0 0.0
        %1134 = vmatpush.msra.mxu0 0.0
        %1135 = vmatpush.msra.mxu0 0.0
        %1136 = vmatpush.msra.mxu0 0.0
        %1137 = vmatpush.msra.mxu0 0.0
        %1138 = vmatpush.msra.mxu0 0.0
        %1139 = vmatpush.msra.mxu0 0.0
        %1140 = vmatpush.msra.mxu0 0.0
        %1141 = vmatpush.msra.mxu0 %v1008
        %1142 = vmatpush.msra.mxu0 %v1006
        %1143 = vmatpush.msra.mxu0 %v1004
        %1144 = vmatpush.msra.mxu0 %v1002
        %1145 = vmatmul.f32.gmra.mxu0 %v1089
        %v1146 = vpop.f32.mrf.mxu0
        %v1147 = vadd.f32 %v1077, %v1146
        %1148 = vmatmul.f32.gmra.mxu0 %v1092
        %v1149 = vpop.f32.mrf.mxu0
        %v1150 = vadd.f32 %v1080, %v1149
        %1151 = vmatmul.f32.gmra.mxu0 %v1095
        %v1152 = vpop.f32.mrf.mxu0
        %v1153 = vadd.f32 %v1083, %v1152
        %1154 = vmatmul.f32.gmra.mxu0 %v1098
        %v1155 = vpop.f32.mrf.mxu0
        %v1156 = vadd.f32 %v1086, %v1155
        %1157 = vdwg.mxu0
        %1159 = vset.pattern.permute.xlu0 0
        %1160 = vperm.xlu0 %1159, %v602
        %v1161 = vpop.permute.xlu0 %1160
        %1164 = vset.pattern.permute.xlu0 0
        %1165 = vperm.xlu0 %1164, %v603
        %v1166 = vpop.permute.xlu0 %1165
        %1169 = vset.pattern.permute.xlu0 0
        %1170 = vperm.xlu0 %1169, %v604
        %v1171 = vpop.permute.xlu0 %1170
        %1174 = vset.pattern.permute.xlu0 0
        %1175 = vperm.xlu0 %1174, %v605
        %v1176 = vpop.permute.xlu0 %1175
        %v1178 = vadd.f32 %v1118, %v1161
        %v1179 = vadd.f32 %v1147, %v1161
        %v1180 = vadd.f32 %v1121, %v1166
        %v1181 = vadd.f32 %v1150, %v1166
        %v1182 = vadd.f32 %v1124, %v1171
        %v1183 = vadd.f32 %v1153, %v1171
        %v1184 = vadd.f32 %v1127, %v1176
        %v1185 = vadd.f32 %v1156, %v1176
        %v1186 = vmax.f32 %v1178, 0.0
        %v1187 = vmax.f32 %v1179, 0.0
        %v1188 = vmax.f32 %v1180, 0.0
        %v1189 = vmax.f32 %v1181, 0.0
        %v1190 = vmax.f32 %v1182, 0.0
        %v1191 = vmax.f32 %v1183, 0.0
        %v1192 = vmax.f32 %v1184, 0.0
        %v1193 = vmax.f32 %v1185, 0.0
        %v1194 = vmax.f32 %v1186, %v1187
        %1195 = vmax.xlane.f32.xlu0 %v1194
        %v1196 = vpop.xlane.xlu0 %1195
        %v1197 = vmax.f32 %v1188, %v1189
        %1198 = vmax.xlane.f32.xlu0 %v1197
        %v1199 = vpop.xlane.xlu0 %1198
        %v1200 = vmax.f32 %v1190, %v1191
        %1201 = vmax.xlane.f32.xlu0 %v1200
        %v1202 = vpop.xlane.xlu0 %1201
        %v1203 = vmax.f32 %v1192, %v1193
        %1204 = vmax.xlane.f32.xlu0 %v1203
        %v1205 = vpop.xlane.xlu0 %1204
        %v1206 = vadd.f32 %v1186, %v1187
        %1207 = vadd.xlane.f32.xlu0 %v1206
        %v1208 = vpop.xlane.xlu0 %1207
        %v1209 = vadd.f32 %v1188, %v1189
        %1210 = vadd.xlane.f32.xlu0 %v1209
        %v1211 = vpop.xlane.xlu0 %1210
        %v1212 = vadd.f32 %v1190, %v1191
        %1213 = vadd.xlane.f32.xlu0 %v1212
        %v1214 = vpop.xlane.xlu0 %1213
        %v1215 = vadd.f32 %v1192, %v1193
        %1216 = vadd.xlane.f32.xlu0 %v1215
        %v1217 = vpop.xlane.xlu0 %1216
        %v1218 = vmul.f32 %v1208, 0.00390625
        %v1219 = vmul.f32 %v1211, 0.00390625
        %v1220 = vmul.f32 %v1214, 0.00390625
        %v1221 = vmul.f32 %v1217, 0.00390625
        %vm1222 = vcmask 7168
        %v1223 = vsel %vm1222, %v1196, %v1218
        %v1224 = vsel %vm1222, %v1199, %v1219
        %v1225 = vsel %vm1222, %v1202, %v1220
        %v1226 = vsel %vm1222, %v1205, %v1221
        %v1228 = vsel %vm1017, %v606, 0
        %1230 = vmatpush.msra.mxu0 0.0
        %1231 = vmatpush.msra.mxu0 0.0
        %1232 = vmatpush.msra.mxu0 0.0
        %1233 = vmatpush.msra.mxu0 0.0
        %1234 = vmatpush.msra.mxu0 0.0
        %1235 = vmatpush.msra.mxu0 0.0
        %1236 = vmatpush.msra.mxu0 0.0
        %1237 = vmatpush.msra.mxu0 0.0
        %1238 = vmatpush.msra.mxu0 0.0
        %1239 = vmatpush.msra.mxu0 0.0
        %1240 = vmatpush.msra.mxu0 0.0
        %1241 = vmatpush.msra.mxu0 0.0
        %1242 = vmatpush.msra.mxu0 %v1226
        %1243 = vmatpush.msra.mxu0 %v1225
        %1244 = vmatpush.msra.mxu0 %v1224
        %1245 = vmatpush.msra.mxu0 %v1223
        %1246 = vmatmul.f32.gmra.mxu0 %v1228
        %v1247 = vpop.f32.mrf.mxu0
        %v1248 = vadd.f32 0.0, %v1247
        %1249 = vdwg.mxu0
        %v1250 = vmax.f32 %v1248, 0.0
        %vm1251 = vcmask 64512
        %v1253 = vsel %vm1251, %v607, 0
        %v1256 = vsel %vm1251, %v608, 0
        %v1259 = vsel %vm1251, %v609, 0
        %v1262 = vsel %vm1251, %v610, 0
        %v1265 = vsel %vm1251, %v611, 0
        %v1268 = vsel %vm1251, %v612, 0
        %v1271 = vsel %vm1251, %v613, 0
        %v1274 = vsel %vm1251, %v614, 0
        %1276 = vmatpush.msra.mxu0 0.0
        %1277 = vmatpush.msra.mxu0 0.0
        %1278 = vmatpush.msra.mxu0 0.0
        %1279 = vmatpush.msra.mxu0 0.0
        %1280 = vmatpush.msra.mxu0 0.0
        %1281 = vmatpush.msra.mxu0 0.0
        %1282 = vmatpush.msra.mxu0 0.0
        %1283 = vmatpush.msra.mxu0 0.0
        %1284 = vmatpush.msra.mxu0 0.0
        %1285 = vmatpush.msra.mxu0 0.0
        %1286 = vmatpush.msra.mxu0 0.0
        %1287 = vmatpush.msra.mxu0 0.0
        %1288 = vmatpush.msra.mxu0 0.0
        %1289 = vmatpush.msra.mxu0 0.0
        %1290 = vmatpush.msra.mxu0 0.0
        %1291 = vmatpush.msra.mxu0 %v1250
        %1292 = vmatmul.f32.gmra.mxu0 %v1253
        %v1293 = vpop.f32.mrf.mxu0
        %v1294 = vadd.f32 0.0, %v1293
        %1295 = vmatmul.f32.gmra.mxu0 %v1256
        %v1296 = vpop.f32.mrf.mxu0
        %v1297 = vadd.f32 0.0, %v1296
        %1298 = vmatmul.f32.gmra.mxu0 %v1259
        %v1299 = vpop.f32.mrf.mxu0
        %v1300 = vadd.f32 0.0, %v1299
        %1301 = vmatmul.f32.gmra.mxu0 %v1262
        %v1302 = vpop.f32.mrf.mxu0
        %v1303 = vadd.f32 0.0, %v1302
        %1304 = vmatmul.f32.gmra.mxu0 %v1265
        %v1305 = vpop.f32.mrf.mxu0
        %v1306 = vadd.f32 0.0, %v1305
        %1307 = vmatmul.f32.gmra.mxu0 %v1268
        %v1308 = vpop.f32.mrf.mxu0
        %v1309 = vadd.f32 0.0, %v1308
        %1310 = vmatmul.f32.gmra.mxu0 %v1271
        %v1311 = vpop.f32.mrf.mxu0
        %v1312 = vadd.f32 0.0, %v1311
        %1313 = vmatmul.f32.gmra.mxu0 %v1274
        %v1314 = vpop.f32.mrf.mxu0
        %v1315 = vadd.f32 0.0, %v1314
        %1316 = vdwg.mxu0
        %vm1317 = vcmask 15360
        %v1318 = vsel %vm1317, %v1294, 0.0
        %1319 = vadd.xlane.f32.xlu0 %v1318
        %v1320 = vpop.xlane.xlu0 %1319
        %v1321 = vsel %vm1317, %v1297, 0.0
        %1322 = vadd.xlane.f32.xlu0 %v1321
        %v1323 = vpop.xlane.xlu0 %1322
        %v1324 = vsel %vm1317, %v1300, 0.0
        %1325 = vadd.xlane.f32.xlu0 %v1324
        %v1326 = vpop.xlane.xlu0 %1325
        %v1327 = vsel %vm1317, %v1303, 0.0
        %1328 = vadd.xlane.f32.xlu0 %v1327
        %v1329 = vpop.xlane.xlu0 %1328
        %v1330 = vsel %vm1317, %v1306, 0.0
        %1331 = vadd.xlane.f32.xlu0 %v1330
        %v1332 = vpop.xlane.xlu0 %1331
        %v1333 = vsel %vm1317, %v1309, 0.0
        %1334 = vadd.xlane.f32.xlu0 %v1333
        %v1335 = vpop.xlane.xlu0 %1334
        %v1336 = vsel %vm1317, %v1312, 0.0
        %1337 = vadd.xlane.f32.xlu0 %v1336
        %v1338 = vpop.xlane.xlu0 %1337
        %v1339 = vsel %vm1317, %v1315, 0.0
        %1340 = vadd.xlane.f32.xlu0 %v1339
        %v1341 = vpop.xlane.xlu0 %1340
        %v1342 = vxor.u32 %v1320, 2147483648
        %v1343 = vxor.u32 %v1323, 2147483648
        %v1344 = vxor.u32 %v1326, 2147483648
        %v1345 = vxor.u32 %v1329, 2147483648
        %v1346 = vxor.u32 %v1332, 2147483648
        %v1347 = vxor.u32 %v1335, 2147483648
        %v1348 = vxor.u32 %v1338, 2147483648
        %v1349 = vxor.u32 %v1341, 2147483648
        %v1350 = vmul.f32 %v1342, 1.442695
        %v1351 = vpow.pop %v1350
        %v1352 = vmul.f32 %v1343, 1.442695
        %v1353 = vpow.pop %v1352
        %v1354 = vmul.f32 %v1344, 1.442695
        %v1355 = vpow.pop %v1354
        %v1356 = vmul.f32 %v1345, 1.442695
        %v1357 = vpow.pop %v1356
        %v1358 = vmul.f32 %v1346, 1.442695
        %v1359 = vpow.pop %v1358
        %v1360 = vmul.f32 %v1347, 1.442695
        %v1361 = vpow.pop %v1360
        %v1362 = vmul.f32 %v1348, 1.442695
        %v1363 = vpow.pop %v1362
        %v1364 = vmul.f32 %v1349, 1.442695
        %v1365 = vpow.pop %v1364
        %v1366 = vadd.f32 %v1351, 1.0
        %v1367 = vadd.f32 %v1353, 1.0
        %v1368 = vadd.f32 %v1355, 1.0
        %v1369 = vadd.f32 %v1357, 1.0
        %v1370 = vadd.f32 %v1359, 1.0
        %v1371 = vadd.f32 %v1361, 1.0
        %v1372 = vadd.f32 %v1363, 1.0
        %v1373 = vadd.f32 %v1365, 1.0
        %v1374 = vrcp.pop %v1366
        %v1375 = vmul.f32 %v1366, %v1374
        %v1376 = vsub.f32 1.0, %v1375
        %v1377 = vmul.f32 %v1374, %v1376
        %v1378 = vadd.f32 %v1374, %v1377
        %vm1379 = vweird.f32 %v1366
        %vm1380 = vweird.f32 %v1374
        %vm1381 = vmor %vm1379, %vm1380
        %v1382 = vsel %vm1381, %v1374, %v1378
        %v1383 = vand.u32 2147483647, %v1366
        %vm1384 = vcmp.eq.f32.partialorder %v1383, 8.507059e+37
        %v1385 = vand.u32 %v1366, 2147483648
        %v1386 = vor.u32 1.1754944e-38, %v1385
        %v1387 = vsel %vm1384, %v1386, %v1382
        %v1388 = vmul.f32 1.0, %v1387
        %v1389 = vrcp.pop %v1367
        %v1390 = vmul.f32 %v1367, %v1389
        %v1391 = vsub.f32 1.0, %v1390
        %v1392 = vmul.f32 %v1389, %v1391
        %v1393 = vadd.f32 %v1389, %v1392
        %vm1394 = vweird.f32 %v1367
        %vm1395 = vweird.f32 %v1389
        %vm1396 = vmor %vm1394, %vm1395
        %v1397 = vsel %vm1396, %v1389, %v1393
        %v1398 = vand.u32 2147483647, %v1367
        %vm1399 = vcmp.eq.f32.partialorder %v1398, 8.507059e+37
        %v1400 = vand.u32 %v1367, 2147483648
        %v1401 = vor.u32 1.1754944e-38, %v1400
        %v1402 = vsel %vm1399, %v1401, %v1397
        %v1403 = vmul.f32 1.0, %v1402
        %v1404 = vrcp.pop %v1368
        %v1405 = vmul.f32 %v1368, %v1404
        %v1406 = vsub.f32 1.0, %v1405
        %v1407 = vmul.f32 %v1404, %v1406
        %v1408 = vadd.f32 %v1404, %v1407
        %vm1409 = vweird.f32 %v1368
        %vm1410 = vweird.f32 %v1404
        %vm1411 = vmor %vm1409, %vm1410
        %v1412 = vsel %vm1411, %v1404, %v1408
        %v1413 = vand.u32 2147483647, %v1368
        %vm1414 = vcmp.eq.f32.partialorder %v1413, 8.507059e+37
        %v1415 = vand.u32 %v1368, 2147483648
        %v1416 = vor.u32 1.1754944e-38, %v1415
        %v1417 = vsel %vm1414, %v1416, %v1412
        %v1418 = vmul.f32 1.0, %v1417
        %v1419 = vrcp.pop %v1369
        %v1420 = vmul.f32 %v1369, %v1419
        %v1421 = vsub.f32 1.0, %v1420
        %v1422 = vmul.f32 %v1419, %v1421
        %v1423 = vadd.f32 %v1419, %v1422
        %vm1424 = vweird.f32 %v1369
        %vm1425 = vweird.f32 %v1419
        %vm1426 = vmor %vm1424, %vm1425
        %v1427 = vsel %vm1426, %v1419, %v1423
        %v1428 = vand.u32 2147483647, %v1369
        %vm1429 = vcmp.eq.f32.partialorder %v1428, 8.507059e+37
        %v1430 = vand.u32 %v1369, 2147483648
        %v1431 = vor.u32 1.1754944e-38, %v1430
        %v1432 = vsel %vm1429, %v1431, %v1427
        %v1433 = vmul.f32 1.0, %v1432
        %v1434 = vrcp.pop %v1370
        %v1435 = vmul.f32 %v1370, %v1434
        %v1436 = vsub.f32 1.0, %v1435
        %v1437 = vmul.f32 %v1434, %v1436
        %v1438 = vadd.f32 %v1434, %v1437
        %vm1439 = vweird.f32 %v1370
        %vm1440 = vweird.f32 %v1434
        %vm1441 = vmor %vm1439, %vm1440
        %v1442 = vsel %vm1441, %v1434, %v1438
        %v1443 = vand.u32 2147483647, %v1370
        %vm1444 = vcmp.eq.f32.partialorder %v1443, 8.507059e+37
        %v1445 = vand.u32 %v1370, 2147483648
        %v1446 = vor.u32 1.1754944e-38, %v1445
        %v1447 = vsel %vm1444, %v1446, %v1442
        %v1448 = vmul.f32 1.0, %v1447
        %v1449 = vrcp.pop %v1371
        %v1450 = vmul.f32 %v1371, %v1449
        %v1451 = vsub.f32 1.0, %v1450
        %v1452 = vmul.f32 %v1449, %v1451
        %v1453 = vadd.f32 %v1449, %v1452
        %vm1454 = vweird.f32 %v1371
        %vm1455 = vweird.f32 %v1449
        %vm1456 = vmor %vm1454, %vm1455
        %v1457 = vsel %vm1456, %v1449, %v1453
        %v1458 = vand.u32 2147483647, %v1371
        %vm1459 = vcmp.eq.f32.partialorder %v1458, 8.507059e+37
        %v1460 = vand.u32 %v1371, 2147483648
        %v1461 = vor.u32 1.1754944e-38, %v1460
        %v1462 = vsel %vm1459, %v1461, %v1457
        %v1463 = vmul.f32 1.0, %v1462
        %v1464 = vrcp.pop %v1372
        %v1465 = vmul.f32 %v1372, %v1464
        %v1466 = vsub.f32 1.0, %v1465
        %v1467 = vmul.f32 %v1464, %v1466
        %v1468 = vadd.f32 %v1464, %v1467
        %vm1469 = vweird.f32 %v1372
        %vm1470 = vweird.f32 %v1464
        %vm1471 = vmor %vm1469, %vm1470
        %v1472 = vsel %vm1471, %v1464, %v1468
        %v1473 = vand.u32 2147483647, %v1372
        %vm1474 = vcmp.eq.f32.partialorder %v1473, 8.507059e+37
        %v1475 = vand.u32 %v1372, 2147483648
        %v1476 = vor.u32 1.1754944e-38, %v1475
        %v1477 = vsel %vm1474, %v1476, %v1472
        %v1478 = vmul.f32 1.0, %v1477
        %v1479 = vrcp.pop %v1373
        %v1480 = vmul.f32 %v1373, %v1479
        %v1481 = vsub.f32 1.0, %v1480
        %v1482 = vmul.f32 %v1479, %v1481
        %v1483 = vadd.f32 %v1479, %v1482
        %vm1484 = vweird.f32 %v1373
        %vm1485 = vweird.f32 %v1479
        %vm1486 = vmor %vm1484, %vm1485
        %v1487 = vsel %vm1486, %v1479, %v1483
        %v1488 = vand.u32 2147483647, %v1373
        %vm1489 = vcmp.eq.f32.partialorder %v1488, 8.507059e+37
        %v1490 = vand.u32 %v1373, 2147483648
        %v1491 = vor.u32 1.1754944e-38, %v1490
        %v1492 = vsel %vm1489, %v1491, %v1487
        %v1493 = vmul.f32 1.0, %v1492
        %v1494 = vmul.f32 %v1388, %v1001
        %v1495 = vmul.f32 %v1388, %v1002
        %v1496 = vmul.f32 %v1403, %v1003
        %v1497 = vmul.f32 %v1403, %v1004
        %v1498 = vmul.f32 %v1418, %v1005
        %v1499 = vmul.f32 %v1418, %v1006
        %v1500 = vmul.f32 %v1433, %v1007
        %v1501 = vmul.f32 %v1433, %v1008
        %v1502 = vmax.f32 %v1494, %v1498
        %v1503 = vmax.f32 %v1496, %v1500
        %v1504 = vmax.f32 %v1502, %v1503
        %v1505 = vrot.slane %v1504, 4
        %v1506 = vmax.f32 %v1504, %v1505
        %v1507 = vrot.slane %v1506, 2
        %v1508 = vmax.f32 %v1506, %v1507
        %v1509 = vrot.slane %v1508, 1
        %v1510 = vmax.f32 %v1508, %v1509
        %v1511 = vmax.f32 %v1495, %v1499
        %v1512 = vmax.f32 %v1497, %v1501
        %v1513 = vmax.f32 %v1511, %v1512
        %v1514 = vrot.slane %v1513, 4
        %v1515 = vmax.f32 %v1513, %v1514
        %v1516 = vrot.slane %v1515, 2
        %v1517 = vmax.f32 %v1515, %v1516
        %v1518 = vrot.slane %v1517, 1
        %v1519 = vmax.f32 %v1517, %v1518
        %v1520 = vadd.f32 %v1494, %v1496
        %v1521 = vadd.f32 %v1520, %v1498
        %v1522 = vadd.f32 %v1521, %v1500
        %v1523 = vrot.slane %v1522, 4
        %v1524 = vadd.f32 %v1522, %v1523
        %v1525 = vrot.slane %v1524, 2
        %v1526 = vadd.f32 %v1524, %v1525
        %v1527 = vrot.slane %v1526, 1
        %v1528 = vadd.f32 %v1526, %v1527
        %v1529 = vadd.f32 %v1495, %v1497
        %v1530 = vadd.f32 %v1529, %v1499
        %v1531 = vadd.f32 %v1530, %v1501
        %v1532 = vrot.slane %v1531, 4
        %v1533 = vadd.f32 %v1531, %v1532
        %v1534 = vrot.slane %v1533, 2
        %v1535 = vadd.f32 %v1533, %v1534
        %v1536 = vrot.slane %v1535, 1
        %v1537 = vadd.f32 %v1535, %v1536
        %v1538 = vmul.f32 %v1528, 0.03125
        %v1539 = vmul.f32 %v1537, 0.03125
        %1540 = vmatpush.msra.mxu0 %v773
        %1541 = vmatpush.msra.mxu0 %v771
        %1542 = vmatpush.msra.mxu0 %v769
        %1543 = vmatpush.msra.mxu0 %v767
        %1544 = vmatpush.msra.mxu0 %v765
        %1545 = vmatpush.msra.mxu0 %v763
        %1546 = vmatpush.msra.mxu0 %v761
        %1547 = vmatpush.msra.mxu0 %v759
        %1548 = vmatpush.msra.mxu0 %v757
        %1549 = vmatpush.msra.mxu0 %v755
        %1550 = vmatpush.msra.mxu0 %v753
        %1551 = vmatpush.msra.mxu0 %v751
        %1552 = vmatpush.msra.mxu0 %v749
        %1553 = vmatpush.msra.mxu0 %v747
        %1554 = vmatpush.msra.mxu0 %v745
        %1555 = vmatpush.msra.mxu0 %v743
        %1556 = vmatmul.f32.gmra.mxu0 %v1538
        %v1557 = vpop.f32.mrf.mxu0
        %v1558 = vadd.f32 0.0, %v1557
        %1559 = vdwg.mxu0
        %1560 = vmatpush.msra.mxu0 %v805
        %1561 = vmatpush.msra.mxu0 %v803
        %1562 = vmatpush.msra.mxu0 %v801
        %1563 = vmatpush.msra.mxu0 %v799
        %1564 = vmatpush.msra.mxu0 %v797
        %1565 = vmatpush.msra.mxu0 %v795
        %1566 = vmatpush.msra.mxu0 %v793
        %1567 = vmatpush.msra.mxu0 %v791
        %1568 = vmatpush.msra.mxu0 %v789
        %1569 = vmatpush.msra.mxu0 %v787
        %1570 = vmatpush.msra.mxu0 %v785
        %1571 = vmatpush.msra.mxu0 %v783
        %1572 = vmatpush.msra.mxu0 %v781
        %1573 = vmatpush.msra.mxu0 %v779
        %1574 = vmatpush.msra.mxu0 %v777
        %1575 = vmatpush.msra.mxu0 %v775
        %1576 = vmatmul.f32.gmra.mxu0 %v1539
        %v1577 = vpop.f32.mrf.mxu0
        %v1578 = vadd.f32 %v1558, %v1577
        %1579 = vdwg.mxu0
        %1580 = vmatpush.msra.mxu0 %v774
        %1581 = vmatpush.msra.mxu0 %v772
        %1582 = vmatpush.msra.mxu0 %v770
        %1583 = vmatpush.msra.mxu0 %v768
        %1584 = vmatpush.msra.mxu0 %v766
        %1585 = vmatpush.msra.mxu0 %v764
        %1586 = vmatpush.msra.mxu0 %v762
        %1587 = vmatpush.msra.mxu0 %v760
        %1588 = vmatpush.msra.mxu0 %v758
        %1589 = vmatpush.msra.mxu0 %v756
        %1590 = vmatpush.msra.mxu0 %v754
        %1591 = vmatpush.msra.mxu0 %v752
        %1592 = vmatpush.msra.mxu0 %v750
        %1593 = vmatpush.msra.mxu0 %v748
        %1594 = vmatpush.msra.mxu0 %v746
        %1595 = vmatpush.msra.mxu0 %v744
        %1596 = vmatmul.f32.gmra.mxu0 %v1538
        %v1597 = vpop.f32.mrf.mxu0
        %v1598 = vadd.f32 0.0, %v1597
        %1599 = vdwg.mxu0
        %1600 = vmatpush.msra.mxu0 %v806
        %1601 = vmatpush.msra.mxu0 %v804
        %1602 = vmatpush.msra.mxu0 %v802
        %1603 = vmatpush.msra.mxu0 %v800
        %1604 = vmatpush.msra.mxu0 %v798
        %1605 = vmatpush.msra.mxu0 %v796
        %1606 = vmatpush.msra.mxu0 %v794
        %1607 = vmatpush.msra.mxu0 %v792
        %1608 = vmatpush.msra.mxu0 %v790
        %1609 = vmatpush.msra.mxu0 %v788
        %1610 = vmatpush.msra.mxu0 %v786
        %1611 = vmatpush.msra.mxu0 %v784
        %1612 = vmatpush.msra.mxu0 %v782
        %1613 = vmatpush.msra.mxu0 %v780
        %1614 = vmatpush.msra.mxu0 %v778
        %1615 = vmatpush.msra.mxu0 %v776
        %1616 = vmatmul.f32.gmra.mxu0 %v1539
        %v1617 = vpop.f32.mrf.mxu0
        %v1618 = vadd.f32 %v1598, %v1617
        %1619 = vdwg.mxu0
        %1620 = vmatpush.msra.mxu0 %v677
        %1621 = vmatpush.msra.mxu0 %v675
        %1622 = vmatpush.msra.mxu0 %v673
        %1623 = vmatpush.msra.mxu0 %v671
        %1624 = vmatpush.msra.mxu0 %v669
        %1625 = vmatpush.msra.mxu0 %v667
        %1626 = vmatpush.msra.mxu0 %v665
        %1627 = vmatpush.msra.mxu0 %v663
        %1628 = vmatpush.msra.mxu0 %v661
        %1629 = vmatpush.msra.mxu0 %v659
        %1630 = vmatpush.msra.mxu0 %v657
        %1631 = vmatpush.msra.mxu0 %v655
        %1632 = vmatpush.msra.mxu0 %v653
        %1633 = vmatpush.msra.mxu0 %v651
        %1634 = vmatpush.msra.mxu0 %v649
        %1635 = vmatpush.msra.mxu0 %v647
        %1636 = vmatmul.f32.gmra.mxu0 %v1510
        %v1637 = vpop.f32.mrf.mxu0
        %v1638 = vadd.f32 %v1578, %v1637
        %1639 = vdwg.mxu0
        %1640 = vmatpush.msra.mxu0 %v709
        %1641 = vmatpush.msra.mxu0 %v707
        %1642 = vmatpush.msra.mxu0 %v705
        %1643 = vmatpush.msra.mxu0 %v703
        %1644 = vmatpush.msra.mxu0 %v701
        %1645 = vmatpush.msra.mxu0 %v699
        %1646 = vmatpush.msra.mxu0 %v697
        %1647 = vmatpush.msra.mxu0 %v695
        %1648 = vmatpush.msra.mxu0 %v693
        %1649 = vmatpush.msra.mxu0 %v691
        %1650 = vmatpush.msra.mxu0 %v689
        %1651 = vmatpush.msra.mxu0 %v687
        %1652 = vmatpush.msra.mxu0 %v685
        %1653 = vmatpush.msra.mxu0 %v683
        %1654 = vmatpush.msra.mxu0 %v681
        %1655 = vmatpush.msra.mxu0 %v679
        %1656 = vmatmul.f32.gmra.mxu0 %v1519
        %v1657 = vpop.f32.mrf.mxu0
        %v1658 = vadd.f32 %v1638, %v1657
        %1659 = vdwg.mxu0
        %1660 = vmatpush.msra.mxu0 %v678
        %1661 = vmatpush.msra.mxu0 %v676
        %1662 = vmatpush.msra.mxu0 %v674
        %1663 = vmatpush.msra.mxu0 %v672
        %1664 = vmatpush.msra.mxu0 %v670
        %1665 = vmatpush.msra.mxu0 %v668
        %1666 = vmatpush.msra.mxu0 %v666
        %1667 = vmatpush.msra.mxu0 %v664
        %1668 = vmatpush.msra.mxu0 %v662
        %1669 = vmatpush.msra.mxu0 %v660
        %1670 = vmatpush.msra.mxu0 %v658
        %1671 = vmatpush.msra.mxu0 %v656
        %1672 = vmatpush.msra.mxu0 %v654
        %1673 = vmatpush.msra.mxu0 %v652
        %1674 = vmatpush.msra.mxu0 %v650
        %1675 = vmatpush.msra.mxu0 %v648
        %1676 = vmatmul.f32.gmra.mxu0 %v1510
        %v1677 = vpop.f32.mrf.mxu0
        %v1678 = vadd.f32 %v1618, %v1677
        %1679 = vdwg.mxu0
        %1680 = vmatpush.msra.mxu0 %v710
        %1681 = vmatpush.msra.mxu0 %v708
        %1682 = vmatpush.msra.mxu0 %v706
        %1683 = vmatpush.msra.mxu0 %v704
        %1684 = vmatpush.msra.mxu0 %v702
        %1685 = vmatpush.msra.mxu0 %v700
        %1686 = vmatpush.msra.mxu0 %v698
        %1687 = vmatpush.msra.mxu0 %v696
        %1688 = vmatpush.msra.mxu0 %v694
        %1689 = vmatpush.msra.mxu0 %v692
        %1690 = vmatpush.msra.mxu0 %v690
        %1691 = vmatpush.msra.mxu0 %v688
        %1692 = vmatpush.msra.mxu0 %v686
        %1693 = vmatpush.msra.mxu0 %v684
        %1694 = vmatpush.msra.mxu0 %v682
        %1695 = vmatpush.msra.mxu0 %v680
        %1696 = vmatmul.f32.gmra.mxu0 %v1519
        %v1697 = vpop.f32.mrf.mxu0
        %v1698 = vadd.f32 %v1678, %v1697
        %1699 = vdwg.mxu0
        %v1700 = vstv %s999
        %v1701 = vadd.f32 %v1658, %v1700
        %v1702 = vadd.f32 %v1698, %v1700
        %v1703 = vxor.u32 %v1701, 2147483648
        %v1704 = vxor.u32 %v1702, 2147483648
        %v1705 = vmul.f32 %v1703, 1.442695
        %v1706 = vpow.pop %v1705
        %v1707 = vmul.f32 %v1704, 1.442695
        %v1708 = vpow.pop %v1707
        %v1709 = vadd.f32 %v1706, 1.0
        %v1710 = vadd.f32 %v1708, 1.0
        %v1711 = vrcp.pop %v1709
        %v1712 = vmul.f32 %v1709, %v1711
        %v1713 = vsub.f32 1.0, %v1712
        %v1714 = vmul.f32 %v1711, %v1713
        %v1715 = vadd.f32 %v1711, %v1714
        %vm1716 = vweird.f32 %v1709
        %vm1717 = vweird.f32 %v1711
        %vm1718 = vmor %vm1716, %vm1717
        %v1719 = vsel %vm1718, %v1711, %v1715
        %v1720 = vand.u32 2147483647, %v1709
        %vm1721 = vcmp.eq.f32.partialorder %v1720, 8.507059e+37
        %v1722 = vand.u32 %v1709, 2147483648
        %v1723 = vor.u32 1.1754944e-38, %v1722
        %v1724 = vsel %vm1721, %v1723, %v1719
        %v1725 = vmul.f32 1.0, %v1724
        %v1726 = vrcp.pop %v1710
        %v1727 = vmul.f32 %v1710, %v1726
        %v1728 = vsub.f32 1.0, %v1727
        %v1729 = vmul.f32 %v1726, %v1728
        %v1730 = vadd.f32 %v1726, %v1729
        %vm1731 = vweird.f32 %v1710
        %vm1732 = vweird.f32 %v1726
        %vm1733 = vmor %vm1731, %vm1732
        %v1734 = vsel %vm1733, %v1726, %v1730
        %v1735 = vand.u32 2147483647, %v1710
        %vm1736 = vcmp.eq.f32.partialorder %v1735, 8.507059e+37
        %v1737 = vand.u32 %v1710, 2147483648
        %v1738 = vor.u32 1.1754944e-38, %v1737
        %v1739 = vsel %vm1736, %v1738, %v1734
        %v1740 = vmul.f32 1.0, %v1739
        %v1741 = vperm.slane %v1725, 0
        %v1742 = vperm.slane %v1740, 0
        %v1743 = vmul.f32 %v1494, %v1741
        %v1744 = vmul.f32 %v1495, %v1742
        %v1745 = vmul.f32 %v1496, %v1741
        %v1746 = vmul.f32 %v1497, %v1742
        %v1747 = vmul.f32 %v1498, %v1741
        %v1748 = vmul.f32 %v1499, %v1742
        %v1749 = vmul.f32 %v1500, %v1741
        %v1750 = vmul.f32 %v1501, %v1742
        %v1751 = vadd.f32 %v1743, %v1001
        %v1752 = vadd.f32 %v1744, %v1002
        %v1753 = vadd.f32 %v1745, %v1003
        %v1754 = vadd.f32 %v1746, %v1004
        %v1755 = vadd.f32 %v1747, %v1005
        %v1756 = vadd.f32 %v1748, %v1006
        %v1757 = vadd.f32 %v1749, %v1007
        %v1758 = vadd.f32 %v1750, %v1008
        %1759 = vst [vmem:[%s586] sm:$0xff] %v1751
        %1760 = vst [vmem:[%s586 + $0x8] sm:$0xff] %v1752
        %1761 = vst [vmem:[%s586 + $0x10] sm:$0xff] %v1753
        %1762 = vst [vmem:[%s586 + $0x18] sm:$0xff] %v1754
        %1763 = vst [vmem:[%s586 + $0x20] sm:$0xff] %v1755
        %1764 = vst [vmem:[%s586 + $0x28] sm:$0xff] %v1756
        %1765 = vst [vmem:[%s586 + $0x30] sm:$0xff] %v1757
        %1766 = vst [vmem:[%s586 + $0x38] sm:$0xff] %v1758
        %v1767 = vmul.f32 %v1448, %v1009
        %v1768 = vmul.f32 %v1448, %v1010
        %v1769 = vmul.f32 %v1463, %v1011
        %v1770 = vmul.f32 %v1463, %v1012
        %v1771 = vmul.f32 %v1478, %v1013
        %v1772 = vmul.f32 %v1478, %v1014
        %v1773 = vmul.f32 %v1493, %v1015
        %v1774 = vmul.f32 %v1493, %v1016
        %v1775 = vmax.f32 %v1767, %v1771
        %v1776 = vmax.f32 %v1769, %v1773
        %v1777 = vmax.f32 %v1775, %v1776
        %v1778 = vrot.slane %v1777, 4
        %v1779 = vmax.f32 %v1777, %v1778
        %v1780 = vrot.slane %v1779, 2
        %v1781 = vmax.f32 %v1779, %v1780
        %v1782 = vrot.slane %v1781, 1
        %v1783 = vmax.f32 %v1781, %v1782
        %v1784 = vmax.f32 %v1768, %v1772
        %v1785 = vmax.f32 %v1770, %v1774
        %v1786 = vmax.f32 %v1784, %v1785
        %v1787 = vrot.slane %v1786, 4
        %v1788 = vmax.f32 %v1786, %v1787
        %v1789 = vrot.slane %v1788, 2
        %v1790 = vmax.f32 %v1788, %v1789
        %v1791 = vrot.slane %v1790, 1
        %v1792 = vmax.f32 %v1790, %v1791
        %v1793 = vadd.f32 %v1767, %v1769
        %v1794 = vadd.f32 %v1793, %v1771
        %v1795 = vadd.f32 %v1794, %v1773
        %v1796 = vrot.slane %v1795, 4
        %v1797 = vadd.f32 %v1795, %v1796
        %v1798 = vrot.slane %v1797, 2
        %v1799 = vadd.f32 %v1797, %v1798
        %v1800 = vrot.slane %v1799, 1
        %v1801 = vadd.f32 %v1799, %v1800
        %v1802 = vadd.f32 %v1768, %v1770
        %v1803 = vadd.f32 %v1802, %v1772
        %v1804 = vadd.f32 %v1803, %v1774
        %v1805 = vrot.slane %v1804, 4
        %v1806 = vadd.f32 %v1804, %v1805
        %v1807 = vrot.slane %v1806, 2
        %v1808 = vadd.f32 %v1806, %v1807
        %v1809 = vrot.slane %v1808, 1
        %v1810 = vadd.f32 %v1808, %v1809
        %v1811 = vmul.f32 %v1801, 0.03125
        %v1812 = vmul.f32 %v1810, 0.03125
        %1813 = vmatpush.msra.mxu0 %v965
        %1814 = vmatpush.msra.mxu0 %v963
        %1815 = vmatpush.msra.mxu0 %v961
        %1816 = vmatpush.msra.mxu0 %v959
        %1817 = vmatpush.msra.mxu0 %v957
        %1818 = vmatpush.msra.mxu0 %v955
        %1819 = vmatpush.msra.mxu0 %v953
        %1820 = vmatpush.msra.mxu0 %v951
        %1821 = vmatpush.msra.mxu0 %v949
        %1822 = vmatpush.msra.mxu0 %v947
        %1823 = vmatpush.msra.mxu0 %v945
        %1824 = vmatpush.msra.mxu0 %v943
        %1825 = vmatpush.msra.mxu0 %v941
        %1826 = vmatpush.msra.mxu0 %v939
        %1827 = vmatpush.msra.mxu0 %v937
        %1828 = vmatpush.msra.mxu0 %v935
        %1829 = vmatmul.f32.gmra.mxu0 %v1811
        %v1830 = vpop.f32.mrf.mxu0
        %v1831 = vadd.f32 0.0, %v1830
        %1832 = vdwg.mxu0
        %1833 = vmatpush.msra.mxu0 %v997
        %1834 = vmatpush.msra.mxu0 %v995
        %1835 = vmatpush.msra.mxu0 %v993
        %1836 = vmatpush.msra.mxu0 %v991
        %1837 = vmatpush.msra.mxu0 %v989
        %1838 = vmatpush.msra.mxu0 %v987
        %1839 = vmatpush.msra.mxu0 %v985
        %1840 = vmatpush.msra.mxu0 %v983
        %1841 = vmatpush.msra.mxu0 %v981
        %1842 = vmatpush.msra.mxu0 %v979
        %1843 = vmatpush.msra.mxu0 %v977
        %1844 = vmatpush.msra.mxu0 %v975
        %1845 = vmatpush.msra.mxu0 %v973
        %1846 = vmatpush.msra.mxu0 %v971
        %1847 = vmatpush.msra.mxu0 %v969
        %1848 = vmatpush.msra.mxu0 %v967
        %1849 = vmatmul.f32.gmra.mxu0 %v1812
        %v1850 = vpop.f32.mrf.mxu0
        %v1851 = vadd.f32 %v1831, %v1850
        %1852 = vdwg.mxu0
        %1853 = vmatpush.msra.mxu0 %v966
        %1854 = vmatpush.msra.mxu0 %v964
        %1855 = vmatpush.msra.mxu0 %v962
        %1856 = vmatpush.msra.mxu0 %v960
        %1857 = vmatpush.msra.mxu0 %v958
        %1858 = vmatpush.msra.mxu0 %v956
        %1859 = vmatpush.msra.mxu0 %v954
        %1860 = vmatpush.msra.mxu0 %v952
        %1861 = vmatpush.msra.mxu0 %v950
        %1862 = vmatpush.msra.mxu0 %v948
        %1863 = vmatpush.msra.mxu0 %v946
        %1864 = vmatpush.msra.mxu0 %v944
        %1865 = vmatpush.msra.mxu0 %v942
        %1866 = vmatpush.msra.mxu0 %v940
        %1867 = vmatpush.msra.mxu0 %v938
        %1868 = vmatpush.msra.mxu0 %v936
        %1869 = vmatmul.f32.gmra.mxu0 %v1811
        %v1870 = vpop.f32.mrf.mxu0
        %v1871 = vadd.f32 0.0, %v1870
        %1872 = vdwg.mxu0
        %1873 = vmatpush.msra.mxu0 %v998
        %1874 = vmatpush.msra.mxu0 %v996
        %1875 = vmatpush.msra.mxu0 %v994
        %1876 = vmatpush.msra.mxu0 %v992
        %1877 = vmatpush.msra.mxu0 %v990
        %1878 = vmatpush.msra.mxu0 %v988
        %1879 = vmatpush.msra.mxu0 %v986
        %1880 = vmatpush.msra.mxu0 %v984
        %1881 = vmatpush.msra.mxu0 %v982
        %1882 = vmatpush.msra.mxu0 %v980
        %1883 = vmatpush.msra.mxu0 %v978
        %1884 = vmatpush.msra.mxu0 %v976
        %1885 = vmatpush.msra.mxu0 %v974
        %1886 = vmatpush.msra.mxu0 %v972
        %1887 = vmatpush.msra.mxu0 %v970
        %1888 = vmatpush.msra.mxu0 %v968
        %1889 = vmatmul.f32.gmra.mxu0 %v1812
        %v1890 = vpop.f32.mrf.mxu0
        %v1891 = vadd.f32 %v1871, %v1890
        %1892 = vdwg.mxu0
        %1893 = vmatpush.msra.mxu0 %v869
        %1894 = vmatpush.msra.mxu0 %v867
        %1895 = vmatpush.msra.mxu0 %v865
        %1896 = vmatpush.msra.mxu0 %v863
        %1897 = vmatpush.msra.mxu0 %v861
        %1898 = vmatpush.msra.mxu0 %v859
        %1899 = vmatpush.msra.mxu0 %v857
        %1900 = vmatpush.msra.mxu0 %v855
        %1901 = vmatpush.msra.mxu0 %v853
        %1902 = vmatpush.msra.mxu0 %v851
        %1903 = vmatpush.msra.mxu0 %v849
        %1904 = vmatpush.msra.mxu0 %v847
        %1905 = vmatpush.msra.mxu0 %v845
        %1906 = vmatpush.msra.mxu0 %v843
        %1907 = vmatpush.msra.mxu0 %v841
        %1908 = vmatpush.msra.mxu0 %v839
        %1909 = vmatmul.f32.gmra.mxu0 %v1783
        %v1910 = vpop.f32.mrf.mxu0
        %v1911 = vadd.f32 %v1851, %v1910
        %1912 = vdwg.mxu0
        %1913 = vmatpush.msra.mxu0 %v901
        %1914 = vmatpush.msra.mxu0 %v899
        %1915 = vmatpush.msra.mxu0 %v897
        %1916 = vmatpush.msra.mxu0 %v895
        %1917 = vmatpush.msra.mxu0 %v893
        %1918 = vmatpush.msra.mxu0 %v891
        %1919 = vmatpush.msra.mxu0 %v889
        %1920 = vmatpush.msra.mxu0 %v887
        %1921 = vmatpush.msra.mxu0 %v885
        %1922 = vmatpush.msra.mxu0 %v883
        %1923 = vmatpush.msra.mxu0 %v881
        %1924 = vmatpush.msra.mxu0 %v879
        %1925 = vmatpush.msra.mxu0 %v877
        %1926 = vmatpush.msra.mxu0 %v875
        %1927 = vmatpush.msra.mxu0 %v873
        %1928 = vmatpush.msra.mxu0 %v871
        %1929 = vmatmul.f32.gmra.mxu0 %v1792
        %v1930 = vpop.f32.mrf.mxu0
        %v1931 = vadd.f32 %v1911, %v1930
        %1932 = vdwg.mxu0
        %1933 = vmatpush.msra.mxu0 %v870
        %1934 = vmatpush.msra.mxu0 %v868
        %1935 = vmatpush.msra.mxu0 %v866
        %1936 = vmatpush.msra.mxu0 %v864
        %1937 = vmatpush.msra.mxu0 %v862
        %1938 = vmatpush.msra.mxu0 %v860
        %1939 = vmatpush.msra.mxu0 %v858
        %1940 = vmatpush.msra.mxu0 %v856
        %1941 = vmatpush.msra.mxu0 %v854
        %1942 = vmatpush.msra.mxu0 %v852
        %1943 = vmatpush.msra.mxu0 %v850
        %1944 = vmatpush.msra.mxu0 %v848
        %1945 = vmatpush.msra.mxu0 %v846
        %1946 = vmatpush.msra.mxu0 %v844
        %1947 = vmatpush.msra.mxu0 %v842
        %1948 = vmatpush.msra.mxu0 %v840
        %1949 = vmatmul.f32.gmra.mxu0 %v1783
        %v1950 = vpop.f32.mrf.mxu0
        %v1951 = vadd.f32 %v1891, %v1950
        %1952 = vdwg.mxu0
        %1953 = vmatpush.msra.mxu0 %v902
        %1954 = vmatpush.msra.mxu0 %v900
        %1955 = vmatpush.msra.mxu0 %v898
        %1956 = vmatpush.msra.mxu0 %v896
        %1957 = vmatpush.msra.mxu0 %v894
        %1958 = vmatpush.msra.mxu0 %v892
        %1959 = vmatpush.msra.mxu0 %v890
        %1960 = vmatpush.msra.mxu0 %v888
        %1961 = vmatpush.msra.mxu0 %v886
        %1962 = vmatpush.msra.mxu0 %v884
        %1963 = vmatpush.msra.mxu0 %v882
        %1964 = vmatpush.msra.mxu0 %v880
        %1965 = vmatpush.msra.mxu0 %v878
        %1966 = vmatpush.msra.mxu0 %v876
        %1967 = vmatpush.msra.mxu0 %v874
        %1968 = vmatpush.msra.mxu0 %v872
        %1969 = vmatmul.f32.gmra.mxu0 %v1792
        %v1970 = vpop.f32.mrf.mxu0
        %v1971 = vadd.f32 %v1951, %v1970
        %1972 = vdwg.mxu0
        %v1973 = vstv %s1000
        %v1974 = vadd.f32 %v1931, %v1973
        %v1975 = vadd.f32 %v1971, %v1973
        %v1976 = vxor.u32 %v1974, 2147483648
        %v1977 = vxor.u32 %v1975, 2147483648
        %v1978 = vmul.f32 %v1976, 1.442695
        %v1979 = vpow.pop %v1978
        %v1980 = vmul.f32 %v1977, 1.442695
        %v1981 = vpow.pop %v1980
        %v1982 = vadd.f32 %v1979, 1.0
        %v1983 = vadd.f32 %v1981, 1.0
        %v1984 = vrcp.pop %v1982
        %v1985 = vmul.f32 %v1982, %v1984
        %v1986 = vsub.f32 1.0, %v1985
        %v1987 = vmul.f32 %v1984, %v1986
        %v1988 = vadd.f32 %v1984, %v1987
        %vm1989 = vweird.f32 %v1982
        %vm1990 = vweird.f32 %v1984
        %vm1991 = vmor %vm1989, %vm1990
        %v1992 = vsel %vm1991, %v1984, %v1988
        %v1993 = vand.u32 2147483647, %v1982
        %vm1994 = vcmp.eq.f32.partialorder %v1993, 8.507059e+37
        %v1995 = vand.u32 %v1982, 2147483648
        %v1996 = vor.u32 1.1754944e-38, %v1995
        %v1997 = vsel %vm1994, %v1996, %v1992
        %v1998 = vmul.f32 1.0, %v1997
        %v1999 = vrcp.pop %v1983
        %v2000 = vmul.f32 %v1983, %v1999
        %v2001 = vsub.f32 1.0, %v2000
        %v2002 = vmul.f32 %v1999, %v2001
        %v2003 = vadd.f32 %v1999, %v2002
        %vm2004 = vweird.f32 %v1983
        %vm2005 = vweird.f32 %v1999
        %vm2006 = vmor %vm2004, %vm2005
        %v2007 = vsel %vm2006, %v1999, %v2003
        %v2008 = vand.u32 2147483647, %v1983
        %vm2009 = vcmp.eq.f32.partialorder %v2008, 8.507059e+37
        %v2010 = vand.u32 %v1983, 2147483648
        %v2011 = vor.u32 1.1754944e-38, %v2010
        %v2012 = vsel %vm2009, %v2011, %v2007
        %v2013 = vmul.f32 1.0, %v2012
        %v2014 = vperm.slane %v1998, 0
        %v2015 = vperm.slane %v2013, 0
        %v2016 = vmul.f32 %v1767, %v2014
        %v2017 = vmul.f32 %v1768, %v2015
        %v2018 = vmul.f32 %v1769, %v2014
        %v2019 = vmul.f32 %v1770, %v2015
        %v2020 = vmul.f32 %v1771, %v2014
        %v2021 = vmul.f32 %v1772, %v2015
        %v2022 = vmul.f32 %v1773, %v2014
        %v2023 = vmul.f32 %v1774, %v2015
        %v2024 = vadd.f32 %v2016, %v1009
        %v2025 = vadd.f32 %v2017, %v1010
        %v2026 = vadd.f32 %v2018, %v1011
        %v2027 = vadd.f32 %v2019, %v1012
        %v2028 = vadd.f32 %v2020, %v1013
        %v2029 = vadd.f32 %v2021, %v1014
        %v2030 = vadd.f32 %v2022, %v1015
        %v2031 = vadd.f32 %v2023, %v1016
        %2032 = vst [vmem:[%s593] sm:$0xff] %v2024
        %2033 = vst [vmem:[%s593 + $0x8] sm:$0xff] %v2025
        %2034 = vst [vmem:[%s593 + $0x10] sm:$0xff] %v2026
        %2035 = vst [vmem:[%s593 + $0x18] sm:$0xff] %v2027
        %2036 = vst [vmem:[%s593 + $0x20] sm:$0xff] %v2028
        %2037 = vst [vmem:[%s593 + $0x28] sm:$0xff] %v2029
        %2038 = vst [vmem:[%s593 + $0x30] sm:$0xff] %v2030
        %2039 = vst [vmem:[%s593 + $0x38] sm:$0xff] %v2031
        %s2040 = sand.u32 %s310, 1
        %s2041 = scalar_lea.sflag [#allocation4], %s2040
        %s2042 = sand.u32 %s310, 1
        %s2043 = smul.addr %s2042, 64
        %s2044 = scalar_lea.vmem [#allocation15], %s2043
        %s2045 = sand.u32 %s336, 1
        %s2046 = scalar_lea.sflag [#allocation17], %s2045
        %s2047 = sand.u32 %s336, 1
        %s2048 = smul.addr %s2047, 64
        %s2049 = scalar_lea.vmem [#allocation16], %s2048
        // Predicated region
        $region97: #{tpu_custom_call.1} parent=67 // pred_check
          %p2050 = pneg %p320
        $region98: #{tpu_custom_call.1} parent=67 // pred_check_branch
          %2052 = sbr.rel (%p2050) target = $region100
        $region99: #{tpu_custom_call.1} parent=67 // pred_region
          %2054 = vsyncadd %s2041, 0
          %s2055 = smul.addr %s40, 8
          %s2056 = smul.addr %s2055, 8
          %s2057 = scalar_lea.hbm %s12, %s2056
          %s2058 = sshll.u32 %s2044, 4
          %s2059 = int_to_ptr.vmem [resolvable:$true] %s2058
          %s2060 = sshll.u32 %s2057, 4
          %s2061 = int_to_ptr.hbm [resolvable:$true] %s2060
          %2066 = dma.vmem_to_hbm [thread:$0]  %s2059, 1024, %s2061, %s2041, 256, 256, 16
        $region100: #{tpu_custom_call.1} parent=67 // pred_fallthru
          _
        // Predicated region
        $region101: #{tpu_custom_call.1} parent=67 // pred_check
          %p2067 = pneg %p346
        $region102: #{tpu_custom_call.1} parent=67 // pred_check_branch
          %2069 = sbr.rel (%p2067) target = $region104
        $region103: #{tpu_custom_call.1} parent=67 // pred_region
          %2071 = vsyncadd %s2046, 0
          %s2072 = smul.addr %s40, 8
          %s2073 = smul.addr %s2072, 8
          %s2074 = scalar_lea.hbm %s13, %s2073
          %s2075 = sshll.u32 %s2049, 4
          %s2076 = int_to_ptr.vmem [resolvable:$true] %s2075
          %s2077 = sshll.u32 %s2074, 4
          %s2078 = int_to_ptr.hbm [resolvable:$true] %s2077
          %2083 = dma.vmem_to_hbm [thread:$0]  %s2076, 1024, %s2078, %s2046, 256, 256, 16
        $region104: #{tpu_custom_call.1} parent=67 // pred_fallthru
          _
      $region68: #{tpu_custom_call.1} parent=5 // pred_fallthru
        _
      %p2084 = scmp.le.s32.totalorder 2, %s35
      // Predicated region
      $region105: #{tpu_custom_call.1} parent=5 // pred_check
        %p2085 = pneg %p2084
      $region106: #{tpu_custom_call.1} parent=5 // pred_check_branch
        %2087 = sbr.rel (%p2085) target = $region108
      $region107: #{tpu_custom_call.1} parent=5 // pred_region
        %s2088 = ssub.s32 %s35, 2
        // Predicated region
        $region109: #{tpu_custom_call.1} parent=107 // pred_check
          %p2089 = pneg %p326
        $region110: #{tpu_custom_call.1} parent=107 // pred_check_branch
          %2091 = sbr.rel (%p2089) target = $region112
        $region111: #{tpu_custom_call.1} parent=107 // pred_region
          %s2092 = sand.u32 %s311, 1
          %s2093 = scalar_lea.sflag [#allocation4], %s2092
          %s2094 = sand.u32 %s311, 1
          %s2095 = smul.addr %s2094, 64
          %s2096 = scalar_lea.vmem [#allocation15], %s2095
          %2098 = dma.done %s2093, 1024
        $region112: #{tpu_custom_call.1} parent=107 // pred_fallthru
          _
        // Predicated region
        $region113: #{tpu_custom_call.1} parent=107 // pred_check
          %p2099 = pneg %p352
        $region114: #{tpu_custom_call.1} parent=107 // pred_check_branch
          %2101 = sbr.rel (%p2099) target = $region116
        $region115: #{tpu_custom_call.1} parent=107 // pred_region
          %s2102 = sand.u32 %s337, 1
          %s2103 = scalar_lea.sflag [#allocation17], %s2102
          %s2104 = sand.u32 %s337, 1
          %s2105 = smul.addr %s2104, 64
          %s2106 = scalar_lea.vmem [#allocation16], %s2105
          %2108 = dma.done %s2103, 1024
        $region116: #{tpu_custom_call.1} parent=107 // pred_fallthru
          _
      $region108: #{tpu_custom_call.1} parent=5 // pred_fallthru
        _
    $region6: #{tpu_custom_call.1} parent=1 // loop_footer
      %s39 = sadd.s32 1, %s35
    $region7: #{tpu_custom_call.1} parent=1 // loop_footer_branch
      %34 = sbr.rel target = $region3
    $region8: #{tpu_custom_call.1} parent=1 // loop_exit
      _
    %2109 = vsyncpa [#allocation3], 1
    %s2110 = scalar_lea.sflag [#allocation3], 1
    %2111 = vsyncpa %s2110, 1
    %2112 = vsyncpa [#allocation7], 1
    %s2113 = scalar_lea.sflag [#allocation7], 1
    %2114 = vsyncpa %s2113, 1
    %2115 = vsyncpa [#allocation10], 1
    %2116 = vsyncpa [#allocation13], 1
    %2117 = vsyncpa [#allocation4], 1
    %s2118 = scalar_lea.sflag [#allocation4], 1
    %2119 = vsyncpa %s2118, 1
    %2120 = vsyncpa [#allocation17], 1
    %s2121 = scalar_lea.sflag [#allocation17], 1
    %2122 = vsyncpa %s2121, 1
    %2123 = vsyncpa [#allocation5], 1
    %s2124 = scalar_lea.sflag [#allocation5], 1
    %2125 = vsyncpa %s2124, 1

</llo_original>
